<compile_context>
chip_gen: v5e
topology: v5e:2x2
jax: 0.10.0
libtpu: 0.0.40
codegen_flags: <defaults>
</compile_context>

<pallas_src>
import functools

import jax
import jax.numpy as jnp
from jax.experimental import pallas as pl
from jax.experimental.pallas import tpu as pltpu


def _full_spec(shape):
    """BlockSpec covering the whole array (kernel runs with no grid)."""
    zeros = (0,) * len(shape)
    return pl.BlockSpec(shape, lambda: zeros)


# ----------------------------------------------------------------------------
# Fused kernel: multi-layer LSTM -> out[:, -1, :] -> Linear
# ----------------------------------------------------------------------------
def _fused_lstm_kernel(*refs, num_layers, T, B, H):
    """refs = (x2d, [wih_t, whh_t, b] * L, wlin_t, blin, out, act_scr, hlast_scr)

    x2d      : (T*B, I)   whole input sequence, flattened over time/batch
    wih_t_l  : (in_l, 4H) input-to-hidden weights, pre-transposed
    whh_t_l  : (H, 4H)    hidden-to-hidden weights, pre-transposed
    b_l      : (1, 4H)    b_ih + b_hh
    wlin_t   : (H, O)     final linear weight, pre-transposed
    blin     : (1, O)
    out      : (T, O)
    act_scr  : (T*B, H)   inter-layer activations (VMEM scratch)
    hlast_scr: (T, H)     last layer's batch row B-1 per timestep (VMEM scratch)
    """
    n_in = 1 + 3 * num_layers + 2
    in_refs = refs[:n_in]
    out_ref = refs[n_in]
    act_scr, hlast_scr = refs[n_in + 1:]

    x_ref = in_refs[0]
    wlin_t_ref = in_refs[n_in - 2]
    blin_ref = in_refs[n_in - 1]

    seq2d = x_ref[...]                                   # (T*B, I)
    for l in range(num_layers):
        wih_t_ref, whh_t_ref, b_ref = in_refs[1 + 3 * l:4 + 3 * l]
        whh_t = whh_t_ref[...]                           # (H, 4H)

        # Hoisted input projection: all T timesteps in one MXU matmul.
        gates_x = (
            jnp.dot(seq2d, wih_t_ref[...], preferred_element_type=jnp.float32)
            + b_ref[...]
        )                                                # (T*B, 4H)

        h = jnp.zeros((B, H), jnp.float32)
        c = jnp.zeros((B, H), jnp.float32)
        is_last = l == num_layers - 1

        for t in range(T):                               # fully unrolled recurrence
            gates = gates_x[t * B:(t + 1) * B, :] + jnp.dot(
                h, whh_t, preferred_element_type=jnp.float32)      # (B, 4H)
            # Whole-vreg transcendentals (2 EUP pushes) instead of 4x 32-lane.
            sig = jax.nn.sigmoid(gates)
            th = jnp.tanh(gates)
            i_g = sig[:, 0 * H:1 * H]
            f_g = sig[:, 1 * H:2 * H]
            g_g = th[:, 2 * H:3 * H]
            o_g = sig[:, 3 * H:4 * H]
            c = f_g * c + i_g * g_g
            h = o_g * jnp.tanh(c)
            if is_last:
                # out[:, -1, :] only consumes batch row B-1 of the last layer.
                hlast_scr[t:t + 1, :] = h[B - 1:B, :]
            else:
                act_scr[t * B:(t + 1) * B, :] = h

        if not is_last:
            seq2d = act_scr[...]                         # (T*B, H) for next layer

    # Fused final linear: (T, H) @ (H, O) + (1, O)
    out_ref[...] = (
        jnp.dot(hlast_scr[...], wlin_t_ref[...],
                preferred_element_type=jnp.float32)
        + blin_ref[...]
    )


# ----------------------------------------------------------------------------
# Wrapper
# ----------------------------------------------------------------------------
def lstm_forward(x, params):
    """Full module forward: multi-layer LSTM -> out[:, -1, :] -> Linear.

    x: (T, B, I) float32.  Returns (T, output_size) float32.
    """
    T, B, I = x.shape
    H = params["lstm"][0]["w_hh"].shape[1]
    O = params["linear"]["w"].shape[0]
    num_layers = len(params["lstm"])

    # TODO(synk): nn.LSTM inter-layer dropout is a training-time stochastic op
    # (identity in eval forward); not applied here.

    args = [jnp.asarray(x, jnp.float32).reshape(T * B, I)]
    in_specs = [_full_spec((T * B, I))]
    for layer in params["lstm"]:
        wih_t = jnp.asarray(layer["w_ih"].T, jnp.float32)           # (in, 4H)
        whh_t = jnp.asarray(layer["w_hh"].T, jnp.float32)           # (H, 4H)
        b = jnp.asarray((layer["b_ih"] + layer["b_hh"])[None, :], jnp.float32)
        args += [wih_t, whh_t, b]
        in_specs += [_full_spec(wih_t.shape), _full_spec(whh_t.shape),
                     _full_spec(b.shape)]
    wlin_t = jnp.asarray(params["linear"]["w"].T, jnp.float32)      # (H, O)
    blin = jnp.asarray(params["linear"]["b"][None, :], jnp.float32)  # (1, O)
    args += [wlin_t, blin]
    in_specs += [_full_spec(wlin_t.shape), _full_spec(blin.shape)]

    kernel = functools.partial(_fused_lstm_kernel, num_layers=num_layers,
                               T=T, B=B, H=H)

    return pl.pallas_call(
        kernel,
        out_shape=jax.ShapeDtypeStruct((T, O), jnp.float32),
        in_specs=in_specs,
        out_specs=_full_spec((T, O)),
        scratch_shapes=[
            pltpu.VMEM((T * B, H), jnp.float32),   # inter-layer activations
            pltpu.VMEM((T, H), jnp.float32),       # last layer, batch row B-1
        ],
    )(*args)


# ----------------------------------------------------------------------------
# Deterministic parameter init (PyTorch-style U(-1/sqrt(H), 1/sqrt(H)))
# ----------------------------------------------------------------------------
def init_params(key, input_size, hidden_size, output_size, num_layers):
    bound = 1.0 / jnp.sqrt(hidden_size)
    params = {"lstm": []}
    for l in range(num_layers):
        in_sz = input_size if l == 0 else hidden_size
        key, k1, k2, k3, k4 = jax.random.split(key, 5)
        params["lstm"].append({
            "w_ih": jax.random.uniform(k1, (4 * hidden_size, in_sz),
                                       jnp.float32, -bound, bound),
            "w_hh": jax.random.uniform(k2, (4 * hidden_size, hidden_size),
                                       jnp.float32, -bound, bound),
            "b_ih": jax.random.uniform(k3, (4 * hidden_size,),
                                       jnp.float32, -bound, bound),
            "b_hh": jax.random.uniform(k4, (4 * hidden_size,),
                                       jnp.float32, -bound, bound),
        })
    key, k5, k6 = jax.random.split(key, 3)
    lin_bound = 1.0 / jnp.sqrt(hidden_size)
    params["linear"] = {
        "w": jax.random.uniform(k5, (output_size, hidden_size),
                                jnp.float32, -lin_bound, lin_bound),
        "b": jax.random.uniform(k6, (output_size,),
                                jnp.float32, -lin_bound, lin_bound),
    }
    return params


# ----------------------------------------------------------------------------
# Pure-JAX reference (for correctness check)
# ----------------------------------------------------------------------------
def lstm_forward_ref(x, params):
    out = x
    for layer in params["lstm"]:
        T, B, _ = out.shape
        H = layer["w_hh"].shape[1]
        b = layer["b_ih"] + layer["b_hh"]

        def step(carry, x_t):
            h, c = carry
            gates = x_t @ layer["w_ih"].T + h @ layer["w_hh"].T + b
            i = jax.nn.sigmoid(gates[:, 0 * H:1 * H])
            f = jax.nn.sigmoid(gates[:, 1 * H:2 * H])
            g = jnp.tanh(gates[:, 2 * H:3 * H])
            o = jax.nn.sigmoid(gates[:, 3 * H:4 * H])
            c_new = f * c + i * g
            h_new = o * jnp.tanh(c_new)
            return (h_new, c_new), h_new

        init = (jnp.zeros((B, H), jnp.float32), jnp.zeros((B, H), jnp.float32))
        _, out = jax.lax.scan(step, init, out)
    out = out[:, -1, :]
    return out @ params["linear"]["w"].T + params["linear"]["b"]


# ----------------------------------------------------------------------------
if __name__ == "__main__":
    # Small shapes consistent with the module's forward:
    # x: (seq=8, batch=4, input_size=16); hidden=32, layers=2, output=3
    T, B = 8, 4
    input_size, hidden_size, output_size, num_layers = 16, 32, 3, 2

    key = jax.random.PRNGKey(0)
    key, kx, kp = jax.random.split(key, 3)
    x = jax.random.normal(kx, (T, B, input_size), jnp.float32)
    params = init_params(kp, input_size, hidden_size, output_size, num_layers)

    out = jax.block_until_ready(lstm_forward(x, params))
    ref = jax.block_until_ready(lstm_forward_ref(x, params))

    assert out.shape == (T, output_size), out.shape
    assert jnp.allclose(out, ref, atol=2e-5, rtol=2e-5), \
        float(jnp.max(jnp.abs(out - ref)))

    print("KERNEL_OK")
</pallas_src>

<mosaic_0001>
module attributes {stable_mosaic.version = 11 : i64} {
  func.func @_fused_lstm_kernel(%arg0: memref<32x16xf32, #tpu.memory_space<vmem>>, %arg1: memref<16x128xf32, #tpu.memory_space<vmem>>, %arg2: memref<32x128xf32, #tpu.memory_space<vmem>>, %arg3: memref<1x128xf32, #tpu.memory_space<vmem>>, %arg4: memref<32x128xf32, #tpu.memory_space<vmem>>, %arg5: memref<32x128xf32, #tpu.memory_space<vmem>>, %arg6: memref<1x128xf32, #tpu.memory_space<vmem>>, %arg7: memref<32x3xf32, #tpu.memory_space<vmem>>, %arg8: memref<1x3xf32, #tpu.memory_space<vmem>>, %arg9: memref<8x3xf32, #tpu.memory_space<vmem>>, %arg10: memref<32x32xf32, #tpu.memory_space<vmem>>, %arg11: memref<8x32xf32, #tpu.memory_space<vmem>>) attributes {dimension_semantics = [], scalar_prefetch = 0 : i64, scratch_operands = 2 : i64, tpu.core_type = #tpu.core_type<tc>} {
    %c0 = arith.constant 0 : index
    %c0_0 = arith.constant 0 : index
    %0 = vector.load %arg0[%c0, %c0_0] : memref<32x16xf32, #tpu.memory_space<vmem>>, vector<32x16xf32>
    %c0_1 = arith.constant 0 : index
    %c0_2 = arith.constant 0 : index
    %1 = vector.load %arg2[%c0_1, %c0_2] : memref<32x128xf32, #tpu.memory_space<vmem>>, vector<32x128xf32>
    %c0_3 = arith.constant 0 : index
    %c0_4 = arith.constant 0 : index
    %2 = vector.load %arg1[%c0_3, %c0_4] : memref<16x128xf32, #tpu.memory_space<vmem>>, vector<16x128xf32>
    %cst = arith.constant dense<0.000000e+00> : vector<32x128xf32>
    %3 = tpu.matmul %0, %2, %cst {dimension_numbers = #tpu.dot_dimension_numbers<[1], [0], [0], [1], [0, 0, 1, 1], [], []>} : vector<32x16xf32>, vector<16x128xf32>, vector<32x128xf32> -> vector<32x128xf32>
    %c0_5 = arith.constant 0 : index
    %c0_6 = arith.constant 0 : index
    %4 = vector.load %arg3[%c0_5, %c0_6] : memref<1x128xf32, #tpu.memory_space<vmem>>, vector<1x128xf32>
    %5 = vector.broadcast %4 : vector<1x128xf32> to vector<32x128xf32>
    %6 = arith.addf %3, %5 : vector<32x128xf32>
    %cst_7 = arith.constant 0.000000e+00 : f32
    %7 = vector.broadcast %cst_7 : f32 to vector<4x32xf32>
    %cst_8 = arith.constant 0.000000e+00 : f32
    %8 = vector.broadcast %cst_8 : f32 to vector<4x32xf32>
    %9 = vector.extract_strided_slice %6 {offsets = [0, 0], sizes = [4, 128], strides = [1, 1]} : vector<32x128xf32> to vector<4x128xf32>
    %cst_9 = arith.constant dense<0.000000e+00> : vector<4x128xf32>
    %10 = tpu.matmul %7, %1, %cst_9 {dimension_numbers = #tpu.dot_dimension_numbers<[1], [0], [0], [1], [0, 0, 1, 1], [], []>} : vector<4x32xf32>, vector<32x128xf32>, vector<4x128xf32> -> vector<4x128xf32>
    %11 = arith.addf %9, %10 : vector<4x128xf32>
    %12 = arith.negf %11 : vector<4x128xf32>
    %13 = math.exp %12 : vector<4x128xf32>
    %cst_10 = arith.constant 1.000000e+00 : f32
    %14 = vector.broadcast %cst_10 : f32 to vector<4x128xf32>
    %15 = arith.addf %14, %13 : vector<4x128xf32>
    %16 = arith.divf %14, %15 : vector<4x128xf32>
    %17 = math.tanh %11 : vector<4x128xf32>
    %18 = vector.extract_strided_slice %16 {offsets = [0, 0], sizes = [4, 32], strides = [1, 1]} : vector<4x128xf32> to vector<4x32xf32>
    %19 = vector.extract_strided_slice %16 {offsets = [0, 32], sizes = [4, 32], strides = [1, 1]} : vector<4x128xf32> to vector<4x32xf32>
    %20 = vector.extract_strided_slice %17 {offsets = [0, 64], sizes = [4, 32], strides = [1, 1]} : vector<4x128xf32> to vector<4x32xf32>
    %21 = vector.extract_strided_slice %16 {offsets = [0, 96], sizes = [4, 32], strides = [1, 1]} : vector<4x128xf32> to vector<4x32xf32>
    %22 = arith.mulf %19, %8 : vector<4x32xf32>
    %23 = arith.mulf %18, %20 : vector<4x32xf32>
    %24 = arith.addf %22, %23 : vector<4x32xf32>
    %25 = math.tanh %24 : vector<4x32xf32>
    %26 = arith.mulf %21, %25 : vector<4x32xf32>
    %c0_11 = arith.constant 0 : index
    %c0_12 = arith.constant 0 : index
    %27 = vector.load %arg10[%c0_11, %c0_12] : memref<32x32xf32, #tpu.memory_space<vmem>>, vector<4x32xf32>
    tpu.vector_store %arg10[%c0_11, %c0_12], %26 {strides = array<i32>} : memref<32x32xf32, #tpu.memory_space<vmem>>, vector<4x32xf32>,
    %28 = vector.extract_strided_slice %6 {offsets = [4, 0], sizes = [4, 128], strides = [1, 1]} : vector<32x128xf32> to vector<4x128xf32>
    %cst_13 = arith.constant dense<0.000000e+00> : vector<4x128xf32>
    %29 = tpu.matmul %26, %1, %cst_13 {dimension_numbers = #tpu.dot_dimension_numbers<[1], [0], [0], [1], [0, 0, 1, 1], [], []>} : vector<4x32xf32>, vector<32x128xf32>, vector<4x128xf32> -> vector<4x128xf32>
    %30 = arith.addf %28, %29 : vector<4x128xf32>
    %31 = arith.negf %30 : vector<4x128xf32>
    %32 = math.exp %31 : vector<4x128xf32>
    %cst_14 = arith.constant 1.000000e+00 : f32
    %33 = vector.broadcast %cst_14 : f32 to vector<4x128xf32>
    %34 = arith.addf %33, %32 : vector<4x128xf32>
    %35 = arith.divf %33, %34 : vector<4x128xf32>
    %36 = math.tanh %30 : vector<4x128xf32>
    %37 = vector.extract_strided_slice %35 {offsets = [0, 0], sizes = [4, 32], strides = [1, 1]} : vector<4x128xf32> to vector<4x32xf32>
    %38 = vector.extract_strided_slice %35 {offsets = [0, 32], sizes = [4, 32], strides = [1, 1]} : vector<4x128xf32> to vector<4x32xf32>
    %39 = vector.extract_strided_slice %36 {offsets = [0, 64], sizes = [4, 32], strides = [1, 1]} : vector<4x128xf32> to vector<4x32xf32>
    %40 = vector.extract_strided_slice %35 {offsets = [0, 96], sizes = [4, 32], strides = [1, 1]} : vector<4x128xf32> to vector<4x32xf32>
    %41 = arith.mulf %38, %24 : vector<4x32xf32>
    %42 = arith.mulf %37, %39 : vector<4x32xf32>
    %43 = arith.addf %41, %42 : vector<4x32xf32>
    %44 = math.tanh %43 : vector<4x32xf32>
    %45 = arith.mulf %40, %44 : vector<4x32xf32>
    %c4 = arith.constant 4 : index
    %c0_15 = arith.constant 0 : index
    %46 = vector.load %arg10[%c4, %c0_15] : memref<32x32xf32, #tpu.memory_space<vmem>>, vector<4x32xf32>
    tpu.vector_store %arg10[%c4, %c0_15], %45 {strides = array<i32>} : memref<32x32xf32, #tpu.memory_space<vmem>>, vector<4x32xf32>,
    %47 = vector.extract_strided_slice %6 {offsets = [8, 0], sizes = [4, 128], strides = [1, 1]} : vector<32x128xf32> to vector<4x128xf32>
    %cst_16 = arith.constant dense<0.000000e+00> : vector<4x128xf32>
    %48 = tpu.matmul %45, %1, %cst_16 {dimension_numbers = #tpu.dot_dimension_numbers<[1], [0], [0], [1], [0, 0, 1, 1], [], []>} : vector<4x32xf32>, vector<32x128xf32>, vector<4x128xf32> -> vector<4x128xf32>
    %49 = arith.addf %47, %48 : vector<4x128xf32>
    %50 = arith.negf %49 : vector<4x128xf32>
    %51 = math.exp %50 : vector<4x128xf32>
    %cst_17 = arith.constant 1.000000e+00 : f32
    %52 = vector.broadcast %cst_17 : f32 to vector<4x128xf32>
    %53 = arith.addf %52, %51 : vector<4x128xf32>
    %54 = arith.divf %52, %53 : vector<4x128xf32>
    %55 = math.tanh %49 : vector<4x128xf32>
    %56 = vector.extract_strided_slice %54 {offsets = [0, 0], sizes = [4, 32], strides = [1, 1]} : vector<4x128xf32> to vector<4x32xf32>
    %57 = vector.extract_strided_slice %54 {offsets = [0, 32], sizes = [4, 32], strides = [1, 1]} : vector<4x128xf32> to vector<4x32xf32>
    %58 = vector.extract_strided_slice %55 {offsets = [0, 64], sizes = [4, 32], strides = [1, 1]} : vector<4x128xf32> to vector<4x32xf32>
    %59 = vector.extract_strided_slice %54 {offsets = [0, 96], sizes = [4, 32], strides = [1, 1]} : vector<4x128xf32> to vector<4x32xf32>
    %60 = arith.mulf %57, %43 : vector<4x32xf32>
    %61 = arith.mulf %56, %58 : vector<4x32xf32>
    %62 = arith.addf %60, %61 : vector<4x32xf32>
    %63 = math.tanh %62 : vector<4x32xf32>
    %64 = arith.mulf %59, %63 : vector<4x32xf32>
    %c8 = arith.constant 8 : index
    %c0_18 = arith.constant 0 : index
    %65 = vector.load %arg10[%c8, %c0_18] : memref<32x32xf32, #tpu.memory_space<vmem>>, vector<4x32xf32>
    tpu.vector_store %arg10[%c8, %c0_18], %64 {strides = array<i32>} : memref<32x32xf32, #tpu.memory_space<vmem>>, vector<4x32xf32>,
    %66 = vector.extract_strided_slice %6 {offsets = [12, 0], sizes = [4, 128], strides = [1, 1]} : vector<32x128xf32> to vector<4x128xf32>
    %cst_19 = arith.constant dense<0.000000e+00> : vector<4x128xf32>
    %67 = tpu.matmul %64, %1, %cst_19 {dimension_numbers = #tpu.dot_dimension_numbers<[1], [0], [0], [1], [0, 0, 1, 1], [], []>} : vector<4x32xf32>, vector<32x128xf32>, vector<4x128xf32> -> vector<4x128xf32>
    %68 = arith.addf %66, %67 : vector<4x128xf32>
    %69 = arith.negf %68 : vector<4x128xf32>
    %70 = math.exp %69 : vector<4x128xf32>
    %cst_20 = arith.constant 1.000000e+00 : f32
    %71 = vector.broadcast %cst_20 : f32 to vector<4x128xf32>
    %72 = arith.addf %71, %70 : vector<4x128xf32>
    %73 = arith.divf %71, %72 : vector<4x128xf32>
    %74 = math.tanh %68 : vector<4x128xf32>
    %75 = vector.extract_strided_slice %73 {offsets = [0, 0], sizes = [4, 32], strides = [1, 1]} : vector<4x128xf32> to vector<4x32xf32>
    %76 = vector.extract_strided_slice %73 {offsets = [0, 32], sizes = [4, 32], strides = [1, 1]} : vector<4x128xf32> to vector<4x32xf32>
    %77 = vector.extract_strided_slice %74 {offsets = [0, 64], sizes = [4, 32], strides = [1, 1]} : vector<4x128xf32> to vector<4x32xf32>
    %78 = vector.extract_strided_slice %73 {offsets = [0, 96], sizes = [4, 32], strides = [1, 1]} : vector<4x128xf32> to vector<4x32xf32>
    %79 = arith.mulf %76, %62 : vector<4x32xf32>
    %80 = arith.mulf %75, %77 : vector<4x32xf32>
    %81 = arith.addf %79, %80 : vector<4x32xf32>
    %82 = math.tanh %81 : vector<4x32xf32>
    %83 = arith.mulf %78, %82 : vector<4x32xf32>
    %c12 = arith.constant 12 : index
    %c0_21 = arith.constant 0 : index
    %84 = vector.load %arg10[%c12, %c0_21] : memref<32x32xf32, #tpu.memory_space<vmem>>, vector<4x32xf32>
    tpu.vector_store %arg10[%c12, %c0_21], %83 {strides = array<i32>} : memref<32x32xf32, #tpu.memory_space<vmem>>, vector<4x32xf32>,
    %85 = vector.extract_strided_slice %6 {offsets = [16, 0], sizes = [4, 128], strides = [1, 1]} : vector<32x128xf32> to vector<4x128xf32>
    %cst_22 = arith.constant dense<0.000000e+00> : vector<4x128xf32>
    %86 = tpu.matmul %83, %1, %cst_22 {dimension_numbers = #tpu.dot_dimension_numbers<[1], [0], [0], [1], [0, 0, 1, 1], [], []>} : vector<4x32xf32>, vector<32x128xf32>, vector<4x128xf32> -> vector<4x128xf32>
    %87 = arith.addf %85, %86 : vector<4x128xf32>
    %88 = arith.negf %87 : vector<4x128xf32>
    %89 = math.exp %88 : vector<4x128xf32>
    %cst_23 = arith.constant 1.000000e+00 : f32
    %90 = vector.broadcast %cst_23 : f32 to vector<4x128xf32>
    %91 = arith.addf %90, %89 : vector<4x128xf32>
    %92 = arith.divf %90, %91 : vector<4x128xf32>
    %93 = math.tanh %87 : vector<4x128xf32>
    %94 = vector.extract_strided_slice %92 {offsets = [0, 0], sizes = [4, 32], strides = [1, 1]} : vector<4x128xf32> to vector<4x32xf32>
    %95 = vector.extract_strided_slice %92 {offsets = [0, 32], sizes = [4, 32], strides = [1, 1]} : vector<4x128xf32> to vector<4x32xf32>
    %96 = vector.extract_strided_slice %93 {offsets = [0, 64], sizes = [4, 32], strides = [1, 1]} : vector<4x128xf32> to vector<4x32xf32>
    %97 = vector.extract_strided_slice %92 {offsets = [0, 96], sizes = [4, 32], strides = [1, 1]} : vector<4x128xf32> to vector<4x32xf32>
    %98 = arith.mulf %95, %81 : vector<4x32xf32>
    %99 = arith.mulf %94, %96 : vector<4x32xf32>
    %100 = arith.addf %98, %99 : vector<4x32xf32>
    %101 = math.tanh %100 : vector<4x32xf32>
    %102 = arith.mulf %97, %101 : vector<4x32xf32>
    %c16 = arith.constant 16 : index
    %c0_24 = arith.constant 0 : index
    %103 = vector.load %arg10[%c16, %c0_24] : memref<32x32xf32, #tpu.memory_space<vmem>>, vector<4x32xf32>
    tpu.vector_store %arg10[%c16, %c0_24], %102 {strides = array<i32>} : memref<32x32xf32, #tpu.memory_space<vmem>>, vector<4x32xf32>,
    %104 = vector.extract_strided_slice %6 {offsets = [20, 0], sizes = [4, 128], strides = [1, 1]} : vector<32x128xf32> to vector<4x128xf32>
    %cst_25 = arith.constant dense<0.000000e+00> : vector<4x128xf32>
    %105 = tpu.matmul %102, %1, %cst_25 {dimension_numbers = #tpu.dot_dimension_numbers<[1], [0], [0], [1], [0, 0, 1, 1], [], []>} : vector<4x32xf32>, vector<32x128xf32>, vector<4x128xf32> -> vector<4x128xf32>
    %106 = arith.addf %104, %105 : vector<4x128xf32>
    %107 = arith.negf %106 : vector<4x128xf32>
    %108 = math.exp %107 : vector<4x128xf32>
    %cst_26 = arith.constant 1.000000e+00 : f32
    %109 = vector.broadcast %cst_26 : f32 to vector<4x128xf32>
    %110 = arith.addf %109, %108 : vector<4x128xf32>
    %111 = arith.divf %109, %110 : vector<4x128xf32>
    %112 = math.tanh %106 : vector<4x128xf32>
    %113 = vector.extract_strided_slice %111 {offsets = [0, 0], sizes = [4, 32], strides = [1, 1]} : vector<4x128xf32> to vector<4x32xf32>
    %114 = vector.extract_strided_slice %111 {offsets = [0, 32], sizes = [4, 32], strides = [1, 1]} : vector<4x128xf32> to vector<4x32xf32>
    %115 = vector.extract_strided_slice %112 {offsets = [0, 64], sizes = [4, 32], strides = [1, 1]} : vector<4x128xf32> to vector<4x32xf32>
    %116 = vector.extract_strided_slice %111 {offsets = [0, 96], sizes = [4, 32], strides = [1, 1]} : vector<4x128xf32> to vector<4x32xf32>
    %117 = arith.mulf %114, %100 : vector<4x32xf32>
    %118 = arith.mulf %113, %115 : vector<4x32xf32>
    %119 = arith.addf %117, %118 : vector<4x32xf32>
    %120 = math.tanh %119 : vector<4x32xf32>
    %121 = arith.mulf %116, %120 : vector<4x32xf32>
    %c20 = arith.constant 20 : index
    %c0_27 = arith.constant 0 : index
    %122 = vector.load %arg10[%c20, %c0_27] : memref<32x32xf32, #tpu.memory_space<vmem>>, vector<4x32xf32>
    tpu.vector_store %arg10[%c20, %c0_27], %121 {strides = array<i32>} : memref<32x32xf32, #tpu.memory_space<vmem>>, vector<4x32xf32>,
    %123 = vector.extract_strided_slice %6 {offsets = [24, 0], sizes = [4, 128], strides = [1, 1]} : vector<32x128xf32> to vector<4x128xf32>
    %cst_28 = arith.constant dense<0.000000e+00> : vector<4x128xf32>
    %124 = tpu.matmul %121, %1, %cst_28 {dimension_numbers = #tpu.dot_dimension_numbers<[1], [0], [0], [1], [0, 0, 1, 1], [], []>} : vector<4x32xf32>, vector<32x128xf32>, vector<4x128xf32> -> vector<4x128xf32>
    %125 = arith.addf %123, %124 : vector<4x128xf32>
    %126 = arith.negf %125 : vector<4x128xf32>
    %127 = math.exp %126 : vector<4x128xf32>
    %cst_29 = arith.constant 1.000000e+00 : f32
    %128 = vector.broadcast %cst_29 : f32 to vector<4x128xf32>
    %129 = arith.addf %128, %127 : vector<4x128xf32>
    %130 = arith.divf %128, %129 : vector<4x128xf32>
    %131 = math.tanh %125 : vector<4x128xf32>
    %132 = vector.extract_strided_slice %130 {offsets = [0, 0], sizes = [4, 32], strides = [1, 1]} : vector<4x128xf32> to vector<4x32xf32>
    %133 = vector.extract_strided_slice %130 {offsets = [0, 32], sizes = [4, 32], strides = [1, 1]} : vector<4x128xf32> to vector<4x32xf32>
    %134 = vector.extract_strided_slice %131 {offsets = [0, 64], sizes = [4, 32], strides = [1, 1]} : vector<4x128xf32> to vector<4x32xf32>
    %135 = vector.extract_strided_slice %130 {offsets = [0, 96], sizes = [4, 32], strides = [1, 1]} : vector<4x128xf32> to vector<4x32xf32>
    %136 = arith.mulf %133, %119 : vector<4x32xf32>
    %137 = arith.mulf %132, %134 : vector<4x32xf32>
    %138 = arith.addf %136, %137 : vector<4x32xf32>
    %139 = math.tanh %138 : vector<4x32xf32>
    %140 = arith.mulf %135, %139 : vector<4x32xf32>
    %c24 = arith.constant 24 : index
    %c0_30 = arith.constant 0 : index
    %141 = vector.load %arg10[%c24, %c0_30] : memref<32x32xf32, #tpu.memory_space<vmem>>, vector<4x32xf32>
    tpu.vector_store %arg10[%c24, %c0_30], %140 {strides = array<i32>} : memref<32x32xf32, #tpu.memory_space<vmem>>, vector<4x32xf32>,
    %142 = vector.extract_strided_slice %6 {offsets = [28, 0], sizes = [4, 128], strides = [1, 1]} : vector<32x128xf32> to vector<4x128xf32>
    %cst_31 = arith.constant dense<0.000000e+00> : vector<4x128xf32>
    %143 = tpu.matmul %140, %1, %cst_31 {dimension_numbers = #tpu.dot_dimension_numbers<[1], [0], [0], [1], [0, 0, 1, 1], [], []>} : vector<4x32xf32>, vector<32x128xf32>, vector<4x128xf32> -> vector<4x128xf32>
    %144 = arith.addf %142, %143 : vector<4x128xf32>
    %145 = arith.negf %144 : vector<4x128xf32>
    %146 = math.exp %145 : vector<4x128xf32>
    %cst_32 = arith.constant 1.000000e+00 : f32
    %147 = vector.broadcast %cst_32 : f32 to vector<4x128xf32>
    %148 = arith.addf %147, %146 : vector<4x128xf32>
    %149 = arith.divf %147, %148 : vector<4x128xf32>
    %150 = math.tanh %144 : vector<4x128xf32>
    %151 = vector.extract_strided_slice %149 {offsets = [0, 0], sizes = [4, 32], strides = [1, 1]} : vector<4x128xf32> to vector<4x32xf32>
    %152 = vector.extract_strided_slice %149 {offsets = [0, 32], sizes = [4, 32], strides = [1, 1]} : vector<4x128xf32> to vector<4x32xf32>
    %153 = vector.extract_strided_slice %150 {offsets = [0, 64], sizes = [4, 32], strides = [1, 1]} : vector<4x128xf32> to vector<4x32xf32>
    %154 = vector.extract_strided_slice %149 {offsets = [0, 96], sizes = [4, 32], strides = [1, 1]} : vector<4x128xf32> to vector<4x32xf32>
    %155 = arith.mulf %152, %138 : vector<4x32xf32>
    %156 = arith.mulf %151, %153 : vector<4x32xf32>
    %157 = arith.addf %155, %156 : vector<4x32xf32>
    %158 = math.tanh %157 : vector<4x32xf32>
    %159 = arith.mulf %154, %158 : vector<4x32xf32>
    %c28 = arith.constant 28 : index
    %c0_33 = arith.constant 0 : index
    %160 = vector.load %arg10[%c28, %c0_33] : memref<32x32xf32, #tpu.memory_space<vmem>>, vector<4x32xf32>
    tpu.vector_store %arg10[%c28, %c0_33], %159 {strides = array<i32>} : memref<32x32xf32, #tpu.memory_space<vmem>>, vector<4x32xf32>,
    %c0_34 = arith.constant 0 : index
    %c0_35 = arith.constant 0 : index
    %161 = vector.load %arg10[%c0_34, %c0_35] : memref<32x32xf32, #tpu.memory_space<vmem>>, vector<32x32xf32>
    %c0_36 = arith.constant 0 : index
    %c0_37 = arith.constant 0 : index
    %162 = vector.load %arg5[%c0_36, %c0_37] : memref<32x128xf32, #tpu.memory_space<vmem>>, vector<32x128xf32>
    %c0_38 = arith.constant 0 : index
    %c0_39 = arith.constant 0 : index
    %163 = vector.load %arg4[%c0_38, %c0_39] : memref<32x128xf32, #tpu.memory_space<vmem>>, vector<32x128xf32>
    %cst_40 = arith.constant dense<0.000000e+00> : vector<32x128xf32>
    %164 = tpu.matmul %161, %163, %cst_40 {dimension_numbers = #tpu.dot_dimension_numbers<[1], [0], [0], [1], [0, 0, 1, 1], [], []>} : vector<32x32xf32>, vector<32x128xf32>, vector<32x128xf32> -> vector<32x128xf32>
    %c0_41 = arith.constant 0 : index
    %c0_42 = arith.constant 0 : index
    %165 = vector.load %arg6[%c0_41, %c0_42] : memref<1x128xf32, #tpu.memory_space<vmem>>, vector<1x128xf32>
    %166 = vector.broadcast %165 : vector<1x128xf32> to vector<32x128xf32>
    %167 = arith.addf %164, %166 : vector<32x128xf32>
    %cst_43 = arith.constant 0.000000e+00 : f32
    %168 = vector.broadcast %cst_43 : f32 to vector<4x32xf32>
    %cst_44 = arith.constant 0.000000e+00 : f32
    %169 = vector.broadcast %cst_44 : f32 to vector<4x32xf32>
    %170 = vector.extract_strided_slice %167 {offsets = [0, 0], sizes = [4, 128], strides = [1, 1]} : vector<32x128xf32> to vector<4x128xf32>
    %cst_45 = arith.constant dense<0.000000e+00> : vector<4x128xf32>
    %171 = tpu.matmul %168, %162, %cst_45 {dimension_numbers = #tpu.dot_dimension_numbers<[1], [0], [0], [1], [0, 0, 1, 1], [], []>} : vector<4x32xf32>, vector<32x128xf32>, vector<4x128xf32> -> vector<4x128xf32>
    %172 = arith.addf %170, %171 : vector<4x128xf32>
    %173 = arith.negf %172 : vector<4x128xf32>
    %174 = math.exp %173 : vector<4x128xf32>
    %cst_46 = arith.constant 1.000000e+00 : f32
    %175 = vector.broadcast %cst_46 : f32 to vector<4x128xf32>
    %176 = arith.addf %175, %174 : vector<4x128xf32>
    %177 = arith.divf %175, %176 : vector<4x128xf32>
    %178 = math.tanh %172 : vector<4x128xf32>
    %179 = vector.extract_strided_slice %177 {offsets = [0, 0], sizes = [4, 32], strides = [1, 1]} : vector<4x128xf32> to vector<4x32xf32>
    %180 = vector.extract_strided_slice %177 {offsets = [0, 32], sizes = [4, 32], strides = [1, 1]} : vector<4x128xf32> to vector<4x32xf32>
    %181 = vector.extract_strided_slice %178 {offsets = [0, 64], sizes = [4, 32], strides = [1, 1]} : vector<4x128xf32> to vector<4x32xf32>
    %182 = vector.extract_strided_slice %177 {offsets = [0, 96], sizes = [4, 32], strides = [1, 1]} : vector<4x128xf32> to vector<4x32xf32>
    %183 = arith.mulf %180, %169 : vector<4x32xf32>
    %184 = arith.mulf %179, %181 : vector<4x32xf32>
    %185 = arith.addf %183, %184 : vector<4x32xf32>
    %186 = math.tanh %185 : vector<4x32xf32>
    %187 = arith.mulf %182, %186 : vector<4x32xf32>
    %188 = vector.extract_strided_slice %187 {offsets = [3, 0], sizes = [1, 32], strides = [1, 1]} : vector<4x32xf32> to vector<1x32xf32>
    %c0_47 = arith.constant 0 : index
    %c0_48 = arith.constant 0 : index
    %189 = vector.load %arg11[%c0_47, %c0_48] : memref<8x32xf32, #tpu.memory_space<vmem>>, vector<1x32xf32>
    tpu.vector_store %arg11[%c0_47, %c0_48], %188 {strides = array<i32>} : memref<8x32xf32, #tpu.memory_space<vmem>>, vector<1x32xf32>,
    %190 = vector.extract_strided_slice %167 {offsets = [4, 0], sizes = [4, 128], strides = [1, 1]} : vector<32x128xf32> to vector<4x128xf32>
    %cst_49 = arith.constant dense<0.000000e+00> : vector<4x128xf32>
    %191 = tpu.matmul %187, %162, %cst_49 {dimension_numbers = #tpu.dot_dimension_numbers<[1], [0], [0], [1], [0, 0, 1, 1], [], []>} : vector<4x32xf32>, vector<32x128xf32>, vector<4x128xf32> -> vector<4x128xf32>
    %192 = arith.addf %190, %191 : vector<4x128xf32>
    %193 = arith.negf %192 : vector<4x128xf32>
    %194 = math.exp %193 : vector<4x128xf32>
    %cst_50 = arith.constant 1.000000e+00 : f32
    %195 = vector.broadcast %cst_50 : f32 to vector<4x128xf32>
    %196 = arith.addf %195, %194 : vector<4x128xf32>
    %197 = arith.divf %195, %196 : vector<4x128xf32>
    %198 = math.tanh %192 : vector<4x128xf32>
    %199 = vector.extract_strided_slice %197 {offsets = [0, 0], sizes = [4, 32], strides = [1, 1]} : vector<4x128xf32> to vector<4x32xf32>
    %200 = vector.extract_strided_slice %197 {offsets = [0, 32], sizes = [4, 32], strides = [1, 1]} : vector<4x128xf32> to vector<4x32xf32>
    %201 = vector.extract_strided_slice %198 {offsets = [0, 64], sizes = [4, 32], strides = [1, 1]} : vector<4x128xf32> to vector<4x32xf32>
    %202 = vector.extract_strided_slice %197 {offsets = [0, 96], sizes = [4, 32], strides = [1, 1]} : vector<4x128xf32> to vector<4x32xf32>
    %203 = arith.mulf %200, %185 : vector<4x32xf32>
    %204 = arith.mulf %199, %201 : vector<4x32xf32>
    %205 = arith.addf %203, %204 : vector<4x32xf32>
    %206 = math.tanh %205 : vector<4x32xf32>
    %207 = arith.mulf %202, %206 : vector<4x32xf32>
    %208 = vector.extract_strided_slice %207 {offsets = [3, 0], sizes = [1, 32], strides = [1, 1]} : vector<4x32xf32> to vector<1x32xf32>
    %c1 = arith.constant 1 : index
    %c0_51 = arith.constant 0 : index
    %209 = vector.load %arg11[%c1, %c0_51] : memref<8x32xf32, #tpu.memory_space<vmem>>, vector<1x32xf32>
    tpu.vector_store %arg11[%c1, %c0_51], %208 {strides = array<i32>} : memref<8x32xf32, #tpu.memory_space<vmem>>, vector<1x32xf32>,
    %210 = vector.extract_strided_slice %167 {offsets = [8, 0], sizes = [4, 128], strides = [1, 1]} : vector<32x128xf32> to vector<4x128xf32>
    %cst_52 = arith.constant dense<0.000000e+00> : vector<4x128xf32>
    %211 = tpu.matmul %207, %162, %cst_52 {dimension_numbers = #tpu.dot_dimension_numbers<[1], [0], [0], [1], [0, 0, 1, 1], [], []>} : vector<4x32xf32>, vector<32x128xf32>, vector<4x128xf32> -> vector<4x128xf32>
    %212 = arith.addf %210, %211 : vector<4x128xf32>
    %213 = arith.negf %212 : vector<4x128xf32>
    %214 = math.exp %213 : vector<4x128xf32>
    %cst_53 = arith.constant 1.000000e+00 : f32
    %215 = vector.broadcast %cst_53 : f32 to vector<4x128xf32>
    %216 = arith.addf %215, %214 : vector<4x128xf32>
    %217 = arith.divf %215, %216 : vector<4x128xf32>
    %218 = math.tanh %212 : vector<4x128xf32>
    %219 = vector.extract_strided_slice %217 {offsets = [0, 0], sizes = [4, 32], strides = [1, 1]} : vector<4x128xf32> to vector<4x32xf32>
    %220 = vector.extract_strided_slice %217 {offsets = [0, 32], sizes = [4, 32], strides = [1, 1]} : vector<4x128xf32> to vector<4x32xf32>
    %221 = vector.extract_strided_slice %218 {offsets = [0, 64], sizes = [4, 32], strides = [1, 1]} : vector<4x128xf32> to vector<4x32xf32>
    %222 = vector.extract_strided_slice %217 {offsets = [0, 96], sizes = [4, 32], strides = [1, 1]} : vector<4x128xf32> to vector<4x32xf32>
    %223 = arith.mulf %220, %205 : vector<4x32xf32>
    %224 = arith.mulf %219, %221 : vector<4x32xf32>
    %225 = arith.addf %223, %224 : vector<4x32xf32>
    %226 = math.tanh %225 : vector<4x32xf32>
    %227 = arith.mulf %222, %226 : vector<4x32xf32>
    %228 = vector.extract_strided_slice %227 {offsets = [3, 0], sizes = [1, 32], strides = [1, 1]} : vector<4x32xf32> to vector<1x32xf32>
    %c2 = arith.constant 2 : index
    %c0_54 = arith.constant 0 : index
    %229 = vector.load %arg11[%c2, %c0_54] : memref<8x32xf32, #tpu.memory_space<vmem>>, vector<1x32xf32>
    tpu.vector_store %arg11[%c2, %c0_54], %228 {strides = array<i32>} : memref<8x32xf32, #tpu.memory_space<vmem>>, vector<1x32xf32>,
    %230 = vector.extract_strided_slice %167 {offsets = [12, 0], sizes = [4, 128], strides = [1, 1]} : vector<32x128xf32> to vector<4x128xf32>
    %cst_55 = arith.constant dense<0.000000e+00> : vector<4x128xf32>
    %231 = tpu.matmul %227, %162, %cst_55 {dimension_numbers = #tpu.dot_dimension_numbers<[1], [0], [0], [1], [0, 0, 1, 1], [], []>} : vector<4x32xf32>, vector<32x128xf32>, vector<4x128xf32> -> vector<4x128xf32>
    %232 = arith.addf %230, %231 : vector<4x128xf32>
    %233 = arith.negf %232 : vector<4x128xf32>
    %234 = math.exp %233 : vector<4x128xf32>
    %cst_56 = arith.constant 1.000000e+00 : f32
    %235 = vector.broadcast %cst_56 : f32 to vector<4x128xf32>
    %236 = arith.addf %235, %234 : vector<4x128xf32>
    %237 = arith.divf %235, %236 : vector<4x128xf32>
    %238 = math.tanh %232 : vector<4x128xf32>
    %239 = vector.extract_strided_slice %237 {offsets = [0, 0], sizes = [4, 32], strides = [1, 1]} : vector<4x128xf32> to vector<4x32xf32>
    %240 = vector.extract_strided_slice %237 {offsets = [0, 32], sizes = [4, 32], strides = [1, 1]} : vector<4x128xf32> to vector<4x32xf32>
    %241 = vector.extract_strided_slice %238 {offsets = [0, 64], sizes = [4, 32], strides = [1, 1]} : vector<4x128xf32> to vector<4x32xf32>
    %242 = vector.extract_strided_slice %237 {offsets = [0, 96], sizes = [4, 32], strides = [1, 1]} : vector<4x128xf32> to vector<4x32xf32>
    %243 = arith.mulf %240, %225 : vector<4x32xf32>
    %244 = arith.mulf %239, %241 : vector<4x32xf32>
    %245 = arith.addf %243, %244 : vector<4x32xf32>
    %246 = math.tanh %245 : vector<4x32xf32>
    %247 = arith.mulf %242, %246 : vector<4x32xf32>
    %248 = vector.extract_strided_slice %247 {offsets = [3, 0], sizes = [1, 32], strides = [1, 1]} : vector<4x32xf32> to vector<1x32xf32>
    %c3 = arith.constant 3 : index
    %c0_57 = arith.constant 0 : index
    %249 = vector.load %arg11[%c3, %c0_57] : memref<8x32xf32, #tpu.memory_space<vmem>>, vector<1x32xf32>
    tpu.vector_store %arg11[%c3, %c0_57], %248 {strides = array<i32>} : memref<8x32xf32, #tpu.memory_space<vmem>>, vector<1x32xf32>,
    %250 = vector.extract_strided_slice %167 {offsets = [16, 0], sizes = [4, 128], strides = [1, 1]} : vector<32x128xf32> to vector<4x128xf32>
    %cst_58 = arith.constant dense<0.000000e+00> : vector<4x128xf32>
    %251 = tpu.matmul %247, %162, %cst_58 {dimension_numbers = #tpu.dot_dimension_numbers<[1], [0], [0], [1], [0, 0, 1, 1], [], []>} : vector<4x32xf32>, vector<32x128xf32>, vector<4x128xf32> -> vector<4x128xf32>
    %252 = arith.addf %250, %251 : vector<4x128xf32>
    %253 = arith.negf %252 : vector<4x128xf32>
    %254 = math.exp %253 : vector<4x128xf32>
    %cst_59 = arith.constant 1.000000e+00 : f32
    %255 = vector.broadcast %cst_59 : f32 to vector<4x128xf32>
    %256 = arith.addf %255, %254 : vector<4x128xf32>
    %257 = arith.divf %255, %256 : vector<4x128xf32>
    %258 = math.tanh %252 : vector<4x128xf32>
    %259 = vector.extract_strided_slice %257 {offsets = [0, 0], sizes = [4, 32], strides = [1, 1]} : vector<4x128xf32> to vector<4x32xf32>
    %260 = vector.extract_strided_slice %257 {offsets = [0, 32], sizes = [4, 32], strides = [1, 1]} : vector<4x128xf32> to vector<4x32xf32>
    %261 = vector.extract_strided_slice %258 {offsets = [0, 64], sizes = [4, 32], strides = [1, 1]} : vector<4x128xf32> to vector<4x32xf32>
    %262 = vector.extract_strided_slice %257 {offsets = [0, 96], sizes = [4, 32], strides = [1, 1]} : vector<4x128xf32> to vector<4x32xf32>
    %263 = arith.mulf %260, %245 : vector<4x32xf32>
    %264 = arith.mulf %259, %261 : vector<4x32xf32>
    %265 = arith.addf %263, %264 : vector<4x32xf32>
    %266 = math.tanh %265 : vector<4x32xf32>
    %267 = arith.mulf %262, %266 : vector<4x32xf32>
    %268 = vector.extract_strided_slice %267 {offsets = [3, 0], sizes = [1, 32], strides = [1, 1]} : vector<4x32xf32> to vector<1x32xf32>
    %c4_60 = arith.constant 4 : index
    %c0_61 = arith.constant 0 : index
    %269 = vector.load %arg11[%c4_60, %c0_61] : memref<8x32xf32, #tpu.memory_space<vmem>>, vector<1x32xf32>
    tpu.vector_store %arg11[%c4_60, %c0_61], %268 {strides = array<i32>} : memref<8x32xf32, #tpu.memory_space<vmem>>, vector<1x32xf32>,
    %270 = vector.extract_strided_slice %167 {offsets = [20, 0], sizes = [4, 128], strides = [1, 1]} : vector<32x128xf32> to vector<4x128xf32>
    %cst_62 = arith.constant dense<0.000000e+00> : vector<4x128xf32>
    %271 = tpu.matmul %267, %162, %cst_62 {dimension_numbers = #tpu.dot_dimension_numbers<[1], [0], [0], [1], [0, 0, 1, 1], [], []>} : vector<4x32xf32>, vector<32x128xf32>, vector<4x128xf32> -> vector<4x128xf32>
    %272 = arith.addf %270, %271 : vector<4x128xf32>
    %273 = arith.negf %272 : vector<4x128xf32>
    %274 = math.exp %273 : vector<4x128xf32>
    %cst_63 = arith.constant 1.000000e+00 : f32
    %275 = vector.broadcast %cst_63 : f32 to vector<4x128xf32>
    %276 = arith.addf %275, %274 : vector<4x128xf32>
    %277 = arith.divf %275, %276 : vector<4x128xf32>
    %278 = math.tanh %272 : vector<4x128xf32>
    %279 = vector.extract_strided_slice %277 {offsets = [0, 0], sizes = [4, 32], strides = [1, 1]} : vector<4x128xf32> to vector<4x32xf32>
    %280 = vector.extract_strided_slice %277 {offsets = [0, 32], sizes = [4, 32], strides = [1, 1]} : vector<4x128xf32> to vector<4x32xf32>
    %281 = vector.extract_strided_slice %278 {offsets = [0, 64], sizes = [4, 32], strides = [1, 1]} : vector<4x128xf32> to vector<4x32xf32>
    %282 = vector.extract_strided_slice %277 {offsets = [0, 96], sizes = [4, 32], strides = [1, 1]} : vector<4x128xf32> to vector<4x32xf32>
    %283 = arith.mulf %280, %265 : vector<4x32xf32>
    %284 = arith.mulf %279, %281 : vector<4x32xf32>
    %285 = arith.addf %283, %284 : vector<4x32xf32>
    %286 = math.tanh %285 : vector<4x32xf32>
    %287 = arith.mulf %282, %286 : vector<4x32xf32>
    %288 = vector.extract_strided_slice %287 {offsets = [3, 0], sizes = [1, 32], strides = [1, 1]} : vector<4x32xf32> to vector<1x32xf32>
    %c5 = arith.constant 5 : index
    %c0_64 = arith.constant 0 : index
    %289 = vector.load %arg11[%c5, %c0_64] : memref<8x32xf32, #tpu.memory_space<vmem>>, vector<1x32xf32>
    tpu.vector_store %arg11[%c5, %c0_64], %288 {strides = array<i32>} : memref<8x32xf32, #tpu.memory_space<vmem>>, vector<1x32xf32>,
    %290 = vector.extract_strided_slice %167 {offsets = [24, 0], sizes = [4, 128], strides = [1, 1]} : vector<32x128xf32> to vector<4x128xf32>
    %cst_65 = arith.constant dense<0.000000e+00> : vector<4x128xf32>
    %291 = tpu.matmul %287, %162, %cst_65 {dimension_numbers = #tpu.dot_dimension_numbers<[1], [0], [0], [1], [0, 0, 1, 1], [], []>} : vector<4x32xf32>, vector<32x128xf32>, vector<4x128xf32> -> vector<4x128xf32>
    %292 = arith.addf %290, %291 : vector<4x128xf32>
    %293 = arith.negf %292 : vector<4x128xf32>
    %294 = math.exp %293 : vector<4x128xf32>
    %cst_66 = arith.constant 1.000000e+00 : f32
    %295 = vector.broadcast %cst_66 : f32 to vector<4x128xf32>
    %296 = arith.addf %295, %294 : vector<4x128xf32>
    %297 = arith.divf %295, %296 : vector<4x128xf32>
    %298 = math.tanh %292 : vector<4x128xf32>
    %299 = vector.extract_strided_slice %297 {offsets = [0, 0], sizes = [4, 32], strides = [1, 1]} : vector<4x128xf32> to vector<4x32xf32>
    %300 = vector.extract_strided_slice %297 {offsets = [0, 32], sizes = [4, 32], strides = [1, 1]} : vector<4x128xf32> to vector<4x32xf32>
    %301 = vector.extract_strided_slice %298 {offsets = [0, 64], sizes = [4, 32], strides = [1, 1]} : vector<4x128xf32> to vector<4x32xf32>
    %302 = vector.extract_strided_slice %297 {offsets = [0, 96], sizes = [4, 32], strides = [1, 1]} : vector<4x128xf32> to vector<4x32xf32>
    %303 = arith.mulf %300, %285 : vector<4x32xf32>
    %304 = arith.mulf %299, %301 : vector<4x32xf32>
    %305 = arith.addf %303, %304 : vector<4x32xf32>
    %306 = math.tanh %305 : vector<4x32xf32>
    %307 = arith.mulf %302, %306 : vector<4x32xf32>
    %308 = vector.extract_strided_slice %307 {offsets = [3, 0], sizes = [1, 32], strides = [1, 1]} : vector<4x32xf32> to vector<1x32xf32>
    %c6 = arith.constant 6 : index
    %c0_67 = arith.constant 0 : index
    %309 = vector.load %arg11[%c6, %c0_67] : memref<8x32xf32, #tpu.memory_space<vmem>>, vector<1x32xf32>
    tpu.vector_store %arg11[%c6, %c0_67], %308 {strides = array<i32>} : memref<8x32xf32, #tpu.memory_space<vmem>>, vector<1x32xf32>,
    %310 = vector.extract_strided_slice %167 {offsets = [28, 0], sizes = [4, 128], strides = [1, 1]} : vector<32x128xf32> to vector<4x128xf32>
    %cst_68 = arith.constant dense<0.000000e+00> : vector<4x128xf32>
    %311 = tpu.matmul %307, %162, %cst_68 {dimension_numbers = #tpu.dot_dimension_numbers<[1], [0], [0], [1], [0, 0, 1, 1], [], []>} : vector<4x32xf32>, vector<32x128xf32>, vector<4x128xf32> -> vector<4x128xf32>
    %312 = arith.addf %310, %311 : vector<4x128xf32>
    %313 = arith.negf %312 : vector<4x128xf32>
    %314 = math.exp %313 : vector<4x128xf32>
    %cst_69 = arith.constant 1.000000e+00 : f32
    %315 = vector.broadcast %cst_69 : f32 to vector<4x128xf32>
    %316 = arith.addf %315, %314 : vector<4x128xf32>
    %317 = arith.divf %315, %316 : vector<4x128xf32>
    %318 = math.tanh %312 : vector<4x128xf32>
    %319 = vector.extract_strided_slice %317 {offsets = [0, 0], sizes = [4, 32], strides = [1, 1]} : vector<4x128xf32> to vector<4x32xf32>
    %320 = vector.extract_strided_slice %317 {offsets = [0, 32], sizes = [4, 32], strides = [1, 1]} : vector<4x128xf32> to vector<4x32xf32>
    %321 = vector.extract_strided_slice %318 {offsets = [0, 64], sizes = [4, 32], strides = [1, 1]} : vector<4x128xf32> to vector<4x32xf32>
    %322 = vector.extract_strided_slice %317 {offsets = [0, 96], sizes = [4, 32], strides = [1, 1]} : vector<4x128xf32> to vector<4x32xf32>
    %323 = arith.mulf %320, %305 : vector<4x32xf32>
    %324 = arith.mulf %319, %321 : vector<4x32xf32>
    %325 = arith.addf %323, %324 : vector<4x32xf32>
    %326 = math.tanh %325 : vector<4x32xf32>
    %327 = arith.mulf %322, %326 : vector<4x32xf32>
    %328 = vector.extract_strided_slice %327 {offsets = [3, 0], sizes = [1, 32], strides = [1, 1]} : vector<4x32xf32> to vector<1x32xf32>
    %c7 = arith.constant 7 : index
    %c0_70 = arith.constant 0 : index
    %329 = vector.load %arg11[%c7, %c0_70] : memref<8x32xf32, #tpu.memory_space<vmem>>, vector<1x32xf32>
    tpu.vector_store %arg11[%c7, %c0_70], %328 {strides = array<i32>} : memref<8x32xf32, #tpu.memory_space<vmem>>, vector<1x32xf32>,
    %c0_71 = arith.constant 0 : index
    %c0_72 = arith.constant 0 : index
    %330 = vector.load %arg11[%c0_71, %c0_72] : memref<8x32xf32, #tpu.memory_space<vmem>>, vector<8x32xf32>
    %c0_73 = arith.constant 0 : index
    %c0_74 = arith.constant 0 : index
    %331 = vector.load %arg7[%c0_73, %c0_74] : memref<32x3xf32, #tpu.memory_space<vmem>>, vector<32x3xf32>
    %cst_75 = arith.constant dense<0.000000e+00> : vector<8x3xf32>
    %332 = tpu.matmul %330, %331, %cst_75 {dimension_numbers = #tpu.dot_dimension_numbers<[1], [0], [0], [1], [0, 0, 1, 1], [], []>} : vector<8x32xf32>, vector<32x3xf32>, vector<8x3xf32> -> vector<8x3xf32>
    %c0_76 = arith.constant 0 : index
    %c0_77 = arith.constant 0 : index
    %333 = vector.load %arg8[%c0_76, %c0_77] : memref<1x3xf32, #tpu.memory_space<vmem>>, vector<1x3xf32>
    %334 = vector.broadcast %333 : vector<1x3xf32> to vector<8x3xf32>
    %335 = arith.addf %332, %334 : vector<8x3xf32>
    %c0_78 = arith.constant 0 : index
    %c0_79 = arith.constant 0 : index
    %336 = vector.load %arg9[%c0_78, %c0_79] : memref<8x3xf32, #tpu.memory_space<vmem>>, vector<8x3xf32>
    tpu.vector_store %arg9[%c0_78, %c0_79], %335 {strides = array<i32>} : memref<8x3xf32, #tpu.memory_space<vmem>>, vector<8x3xf32>,
    return
  }
}

</mosaic_0001>

<llo_original>
// kernel: tpu_custom_call.1
$region0: #{tpu_custom_call.1}
  #allocation0 [shape = 'u32[]', space=smem, size = 0x4, offset = 0x4, fixed_abs, tag = 'smem constant byte address 0x4 - core index']
  #allocation1 [shape = 'u32[72,128]{1,0:T(1,128)}', space=vmem, size = 0x9000, scoped, tag = 'internal scratch']
  #allocation2 [shape = 'f32[32,32]{1,0:T(8,128)}', space=vmem, size = 0x4000, scoped, tag = 'scratch operand']
  #allocation3 [shape = 'f32[8,32]{1,0:T(8,128)}', space=vmem, size = 0x1000, scoped, tag = 'scratch operand']
  %s0 = inlined_call_operand.vmem [shape: f32[32,16], index: 0, kind: input, shape index: {}]
  %s1 = inlined_call_operand.vmem [shape: f32[16,128], index: 1, kind: input, shape index: {}]
  %s2 = inlined_call_operand.vmem [shape: f32[32,128], index: 2, kind: input, shape index: {}]
  %s3 = inlined_call_operand.vmem [shape: f32[1,128], index: 3, kind: input, shape index: {}]
  %s4 = inlined_call_operand.vmem [shape: f32[32,128], index: 4, kind: input, shape index: {}]
  %s5 = inlined_call_operand.hbm [shape: f32[32,128], index: 5, kind: input, shape index: {}]
  %s6 = inlined_call_operand.vmem [shape: f32[1,128], index: 6, kind: input, shape index: {}]
  %s7 = inlined_call_operand.vmem [shape: f32[32,3], index: 7, kind: input, shape index: {}]
  %s8 = inlined_call_operand.vmem [shape: f32[1,3], index: 8, kind: input, shape index: {}]
  %s9 = inlined_call_operand.vmem [shape: f32[8,3], index: 9, kind: output, shape index: {}]
  %s10 = sld [smem:[#allocation0]]
  $region50: #{tpu_custom_call.1} parent=0
    _
  %s12 = ssub.s32 1, %s10
  %s13 = scalar_select 0, %s12, %s10
  $region1: #{tpu_custom_call.1} parent=0
    #allocation4 [shape = 'u8[16384]{0}', space=vmem, size = 0x4000, scoped, tag = 'input window, operand 5, single buffered']
    #allocation5 [shape = 's32[1]{0}', space=sflag, size = 0x4, scoped, tag = 'scoped memory for tpu_custom_call.1']
    %14 = vsyncpa [#allocation5], 0
    // Predicated region
    $region2: #{tpu_custom_call.1} parent=1 // pred_check
      _
    $region3: #{tpu_custom_call.1} parent=1 // pred_check_branch
      %16 = sbr.rel (0) target = $region5
    $region4: #{tpu_custom_call.1} parent=1 // pred_region
      _
    $region5: #{tpu_custom_call.1} parent=1 // pred_fallthru
      _
    // Predicated region
    $region6: #{tpu_custom_call.1} parent=1 // pred_check
      _
    $region7: #{tpu_custom_call.1} parent=1 // pred_check_branch
      %18 = sbr.rel (0) target = $region9
    $region8: #{tpu_custom_call.1} parent=1 // pred_region
      _
    $region9: #{tpu_custom_call.1} parent=1 // pred_fallthru
      _
    // Predicated region
    $region10: #{tpu_custom_call.1} parent=1 // pred_check
      _
    $region11: #{tpu_custom_call.1} parent=1 // pred_check_branch
      %20 = sbr.rel (0) target = $region13
    $region12: #{tpu_custom_call.1} parent=1 // pred_region
      _
    $region13: #{tpu_custom_call.1} parent=1 // pred_fallthru
      _
    // Predicated region
    $region14: #{tpu_custom_call.1} parent=1 // pred_check
      _
    $region15: #{tpu_custom_call.1} parent=1 // pred_check_branch
      %22 = sbr.rel (0) target = $region17
    $region16: #{tpu_custom_call.1} parent=1 // pred_region
      _
    $region17: #{tpu_custom_call.1} parent=1 // pred_fallthru
      _
    // Predicated region
    $region18: #{tpu_custom_call.1} parent=1 // pred_check
      _
    $region19: #{tpu_custom_call.1} parent=1 // pred_check_branch
      %24 = sbr.rel (0) target = $region21
    $region20: #{tpu_custom_call.1} parent=1 // pred_region
      _
    $region21: #{tpu_custom_call.1} parent=1 // pred_fallthru
      _
    // Predicated region
    $region22: #{tpu_custom_call.1} parent=1 // pred_check
      _
    $region23: #{tpu_custom_call.1} parent=1 // pred_check_branch
      %26 = sbr.rel (0) target = $region25
    $region24: #{tpu_custom_call.1} parent=1 // pred_region
      %28 = vsyncadd [#allocation5], 0
      %s29 = sshll.u32 %s5, 4
      %s30 = int_to_ptr.hbm [resolvable:$true] %s29
      %s31 = sshll.u32 [#allocation4], 4
      %s32 = int_to_ptr.vmem [resolvable:$true] %s31
      %37 = dma.hbm_to_vmem [thread:$0]  %s30, 512, %s32, [#allocation5], 128, 128, 8
    $region25: #{tpu_custom_call.1} parent=1 // pred_fallthru
      _
    // Predicated region
    $region26: #{tpu_custom_call.1} parent=1 // pred_check
      _
    $region27: #{tpu_custom_call.1} parent=1 // pred_check_branch
      %39 = sbr.rel (0) target = $region29
    $region28: #{tpu_custom_call.1} parent=1 // pred_region
      _
    $region29: #{tpu_custom_call.1} parent=1 // pred_fallthru
      _
    // Predicated region
    $region30: #{tpu_custom_call.1} parent=1 // pred_check
      _
    $region31: #{tpu_custom_call.1} parent=1 // pred_check_branch
      %41 = sbr.rel (0) target = $region33
    $region32: #{tpu_custom_call.1} parent=1 // pred_region
      _
    $region33: #{tpu_custom_call.1} parent=1 // pred_fallthru
      _
    // Predicated region
    $region34: #{tpu_custom_call.1} parent=1 // pred_check
      _
    $region35: #{tpu_custom_call.1} parent=1 // pred_check_branch
      %43 = sbr.rel (0) target = $region37
    $region36: #{tpu_custom_call.1} parent=1 // pred_region
      _
    $region37: #{tpu_custom_call.1} parent=1 // pred_fallthru
      _
    // Predicated region
    $region38: #{tpu_custom_call.1} parent=1 // pred_check
      _
    $region39: #{tpu_custom_call.1} parent=1 // pred_check_branch
      %45 = sbr.rel (0) target = $region41
    $region40: #{tpu_custom_call.1} parent=1 // pred_region
      %47 = dma.done [#allocation5], 512
    $region41: #{tpu_custom_call.1} parent=1 // pred_fallthru
      _
    %v48 = vld [vmem:[%s0] sm:$0xff]
    %v49 = vld [vmem:[%s0 + $0x8] sm:$0xff]
    %v50 = vld [vmem:[%s0 + $0x10] sm:$0xff]
    %v51 = vld [vmem:[%s0 + $0x18] sm:$0xff]
    %v52 = vld [vmem:[%s2] sm:$0xff]
    %v53 = vld [vmem:[%s2 + $0x8] sm:$0xff]
    %v54 = vld [vmem:[%s2 + $0x10] sm:$0xff]
    %v55 = vld [vmem:[%s2 + $0x18] sm:$0xff]
    %v56 = vld [vmem:[%s1] sm:$0xff]
    %v57 = vld [vmem:[%s1 + $0x8] sm:$0xff]
    %v58 = vld [vmem:[%s3] sm:$0x1]
    %v60 = vperm.slane %v58, 0
    %vm62 = vcmask 130048
    %v64 = vsel %vm62, %v48, 0
    %v67 = vsel %vm62, %v49, 0
    %v70 = vsel %vm62, %v50, 0
    %v73 = vsel %vm62, %v51, 0
    %75 = vmatpush.msra.mxu0 0.0
    %76 = vmatpush.msra.mxu0 0.0
    %77 = vmatpush.msra.mxu0 0.0
    %78 = vmatpush.msra.mxu0 0.0
    %79 = vmatpush.msra.mxu0 0.0
    %80 = vmatpush.msra.mxu0 0.0
    %81 = vmatpush.msra.mxu0 0.0
    %82 = vmatpush.msra.mxu0 0.0
    %83 = vmatpush.msra.mxu0 0.0
    %84 = vmatpush.msra.mxu0 0.0
    %85 = vmatpush.msra.mxu0 0.0
    %86 = vmatpush.msra.mxu0 0.0
    %87 = vmatpush.msra.mxu0 0.0
    %88 = vmatpush.msra.mxu0 0.0
    %89 = vmatpush.msra.mxu0 %v57
    %90 = vmatpush.msra.mxu0 %v56
    %91 = vmatmul.f32.gmra.mxu0 %v64
    %v92 = vpop.f32.mrf.mxu0
    %v93 = vadd.f32 %v60, %v92
    %94 = vmatmul.f32.gmra.mxu0 %v67
    %v95 = vpop.f32.mrf.mxu0
    %v96 = vadd.f32 %v60, %v95
    %97 = vmatmul.f32.gmra.mxu0 %v70
    %v98 = vpop.f32.mrf.mxu0
    %v99 = vadd.f32 %v60, %v98
    %100 = vmatmul.f32.gmra.mxu0 %v73
    %v101 = vpop.f32.mrf.mxu0
    %v102 = vadd.f32 %v60, %v101
    %103 = vdwg.mxu0
    %vm104 = vcmask 261120
    %v106 = vsel %vm104, 0.0, 0
    %108 = vmatpush.msra.mxu0 0.0
    %109 = vmatpush.msra.mxu0 0.0
    %110 = vmatpush.msra.mxu0 0.0
    %111 = vmatpush.msra.mxu0 0.0
    %112 = vmatpush.msra.mxu0 0.0
    %113 = vmatpush.msra.mxu0 0.0
    %114 = vmatpush.msra.mxu0 0.0
    %115 = vmatpush.msra.mxu0 0.0
    %116 = vmatpush.msra.mxu0 0.0
    %117 = vmatpush.msra.mxu0 0.0
    %118 = vmatpush.msra.mxu0 0.0
    %119 = vmatpush.msra.mxu0 0.0
    %120 = vmatpush.msra.mxu0 %v55
    %121 = vmatpush.msra.mxu0 %v54
    %122 = vmatpush.msra.mxu0 %v53
    %123 = vmatpush.msra.mxu0 %v52
    %124 = vmatmul.f32.gmra.mxu0 %v106
    %v125 = vpop.f32.mrf.mxu0
    %v126 = vadd.f32 0.0, %v125
    %127 = vdwg.mxu0
    %v128 = vadd.f32 %v93, %v126
    %v129 = vxor.u32 %v128, 2147483648
    %v130 = vmul.f32 %v129, 1.442695
    %v131 = vpow.pop %v130
    %v132 = vadd.f32 %v131, 1.0
    %v133 = vrcp.pop %v132
    %v134 = vmul.f32 %v132, %v133
    %v135 = vsub.f32 1.0, %v134
    %v136 = vmul.f32 %v133, %v135
    %v137 = vadd.f32 %v133, %v136
    %vm138 = vweird.f32 %v132
    %vm139 = vweird.f32 %v133
    %vm140 = vmor %vm138, %vm139
    %v141 = vsel %vm140, %v133, %v137
    %v142 = vand.u32 2147483647, %v132
    %vm143 = vcmp.eq.f32.partialorder %v142, 8.507059e+37
    %v144 = vand.u32 %v132, 2147483648
    %v145 = vor.u32 1.1754944e-38, %v144
    %v146 = vsel %vm143, %v145, %v141
    %v147 = vmul.f32 1.0, %v146
    %v148 = vtanh.pop %v128
    %v149 = vmul.f32 %v147, 0.0
    %151 = vrot.lane.b32.xlu0 %v148, 64
    %v152 = vpop.permute.xlu0 %151
    %v154 = vmul.f32 %v147, %v152
    %156 = vrot.lane.b32.xlu0 %v154, 32
    %v157 = vpop.permute.xlu0 %156
    %v159 = vadd.f32 %v149, %v157
    %v160 = vtanh.pop %v159
    %162 = vrot.lane.b32.xlu0 %v160, 64
    %v163 = vpop.permute.xlu0 %162
    %v165 = vmul.f32 %v147, %v163
    %167 = vrot.lane.b32.xlu0 %v165, 32
    %v168 = vpop.permute.xlu0 %167
    %vm170 = vcmask 257024
    %171 = vst.msk [vmem:[#allocation2] sm:$0xf] %vm170, %v168
    %v172 = vsel %vm104, %v168, 0
    %174 = vmatpush.msra.mxu0 0.0
    %175 = vmatpush.msra.mxu0 0.0
    %176 = vmatpush.msra.mxu0 0.0
    %177 = vmatpush.msra.mxu0 0.0
    %178 = vmatpush.msra.mxu0 0.0
    %179 = vmatpush.msra.mxu0 0.0
    %180 = vmatpush.msra.mxu0 0.0
    %181 = vmatpush.msra.mxu0 0.0
    %182 = vmatpush.msra.mxu0 0.0
    %183 = vmatpush.msra.mxu0 0.0
    %184 = vmatpush.msra.mxu0 0.0
    %185 = vmatpush.msra.mxu0 0.0
    %186 = vmatpush.msra.mxu0 %v55
    %187 = vmatpush.msra.mxu0 %v54
    %188 = vmatpush.msra.mxu0 %v53
    %189 = vmatpush.msra.mxu0 %v52
    %190 = vmatmul.f32.gmra.mxu0 %v172
    %v191 = vpop.f32.mrf.mxu0
    %v192 = vadd.f32 0.0, %v191
    %193 = vdwg.mxu0
    %v195 = vrot.slane %v192, 4
    %v197 = vadd.f32 %v93, %v195
    %v198 = vxor.u32 %v197, 2147483648
    %v199 = vmul.f32 %v198, 1.442695
    %v200 = vpow.pop %v199
    %v201 = vadd.f32 %v200, 1.0
    %v202 = vrcp.pop %v201
    %v203 = vmul.f32 %v201, %v202
    %v204 = vsub.f32 1.0, %v203
    %v205 = vmul.f32 %v202, %v204
    %v206 = vadd.f32 %v202, %v205
    %vm207 = vweird.f32 %v201
    %vm208 = vweird.f32 %v202
    %vm209 = vmor %vm207, %vm208
    %v210 = vsel %vm209, %v202, %v206
    %v211 = vand.u32 2147483647, %v201
    %vm212 = vcmp.eq.f32.partialorder %v211, 8.507059e+37
    %v213 = vand.u32 %v201, 2147483648
    %v214 = vor.u32 1.1754944e-38, %v213
    %v215 = vsel %vm212, %v214, %v210
    %v216 = vmul.f32 1.0, %v215
    %v217 = vtanh.pop %v197
    %v219 = vrot.slane %v159, 4
    %v221 = vmul.f32 %v216, %v219
    %223 = vrot.lane.b32.xlu0 %v217, 64
    %v224 = vpop.permute.xlu0 %223
    %v226 = vmul.f32 %v216, %v224
    %228 = vrot.lane.b32.xlu0 %v226, 32
    %v229 = vpop.permute.xlu0 %228
    %v231 = vadd.f32 %v221, %v229
    %v232 = vtanh.pop %v231
    %234 = vrot.lane.b32.xlu0 %v232, 64
    %v235 = vpop.permute.xlu0 %234
    %v237 = vmul.f32 %v216, %v235
    %239 = vrot.lane.b32.xlu0 %v237, 32
    %v240 = vpop.permute.xlu0 %239
    %vm242 = vcmask 261124
    %243 = vst.msk [vmem:[#allocation2] sm:$0xf0] %vm242, %v240
    %v244 = vrot.slane %v237, 4
    %245 = vrot.lane.b32.xlu0 %v244, 32
    %v246 = vpop.permute.xlu0 %245
    %v247 = vsel %vm104, %v246, 0
    %249 = vmatpush.msra.mxu0 0.0
    %250 = vmatpush.msra.mxu0 0.0
    %251 = vmatpush.msra.mxu0 0.0
    %252 = vmatpush.msra.mxu0 0.0
    %253 = vmatpush.msra.mxu0 0.0
    %254 = vmatpush.msra.mxu0 0.0
    %255 = vmatpush.msra.mxu0 0.0
    %256 = vmatpush.msra.mxu0 0.0
    %257 = vmatpush.msra.mxu0 0.0
    %258 = vmatpush.msra.mxu0 0.0
    %259 = vmatpush.msra.mxu0 0.0
    %260 = vmatpush.msra.mxu0 0.0
    %261 = vmatpush.msra.mxu0 %v55
    %262 = vmatpush.msra.mxu0 %v54
    %263 = vmatpush.msra.mxu0 %v53
    %264 = vmatpush.msra.mxu0 %v52
    %265 = vmatmul.f32.gmra.mxu0 %v247
    %v266 = vpop.f32.mrf.mxu0
    %v267 = vadd.f32 0.0, %v266
    %268 = vdwg.mxu0
    %v269 = vadd.f32 %v96, %v267
    %v270 = vxor.u32 %v269, 2147483648
    %v271 = vmul.f32 %v270, 1.442695
    %v272 = vpow.pop %v271
    %v273 = vadd.f32 %v272, 1.0
    %v274 = vrcp.pop %v273
    %v275 = vmul.f32 %v273, %v274
    %v276 = vsub.f32 1.0, %v275
    %v277 = vmul.f32 %v274, %v276
    %v278 = vadd.f32 %v274, %v277
    %vm279 = vweird.f32 %v273
    %vm280 = vweird.f32 %v274
    %vm281 = vmor %vm279, %vm280
    %v282 = vsel %vm281, %v274, %v278
    %v283 = vand.u32 2147483647, %v273
    %vm284 = vcmp.eq.f32.partialorder %v283, 8.507059e+37
    %v285 = vand.u32 %v273, 2147483648
    %v286 = vor.u32 1.1754944e-38, %v285
    %v287 = vsel %vm284, %v286, %v282
    %v288 = vmul.f32 1.0, %v287
    %v289 = vtanh.pop %v269
    %v291 = vrot.slane %v231, 4
    %v293 = vmul.f32 %v288, %v291
    %295 = vrot.lane.b32.xlu0 %v289, 64
    %v296 = vpop.permute.xlu0 %295
    %v298 = vmul.f32 %v288, %v296
    %300 = vrot.lane.b32.xlu0 %v298, 32
    %v301 = vpop.permute.xlu0 %300
    %v303 = vadd.f32 %v293, %v301
    %v304 = vtanh.pop %v303
    %306 = vrot.lane.b32.xlu0 %v304, 64
    %v307 = vpop.permute.xlu0 %306
    %v309 = vmul.f32 %v288, %v307
    %311 = vrot.lane.b32.xlu0 %v309, 32
    %v312 = vpop.permute.xlu0 %311
    %314 = vst.msk [vmem:[#allocation2 + $0x8] sm:$0xf] %vm170, %v312
    %v315 = vsel %vm104, %v312, 0
    %317 = vmatpush.msra.mxu0 0.0
    %318 = vmatpush.msra.mxu0 0.0
    %319 = vmatpush.msra.mxu0 0.0
    %320 = vmatpush.msra.mxu0 0.0
    %321 = vmatpush.msra.mxu0 0.0
    %322 = vmatpush.msra.mxu0 0.0
    %323 = vmatpush.msra.mxu0 0.0
    %324 = vmatpush.msra.mxu0 0.0
    %325 = vmatpush.msra.mxu0 0.0
    %326 = vmatpush.msra.mxu0 0.0
    %327 = vmatpush.msra.mxu0 0.0
    %328 = vmatpush.msra.mxu0 0.0
    %329 = vmatpush.msra.mxu0 %v55
    %330 = vmatpush.msra.mxu0 %v54
    %331 = vmatpush.msra.mxu0 %v53
    %332 = vmatpush.msra.mxu0 %v52
    %333 = vmatmul.f32.gmra.mxu0 %v315
    %v334 = vpop.f32.mrf.mxu0
    %v335 = vadd.f32 0.0, %v334
    %336 = vdwg.mxu0
    %v338 = vrot.slane %v335, 4
    %v340 = vadd.f32 %v96, %v338
    %v341 = vxor.u32 %v340, 2147483648
    %v342 = vmul.f32 %v341, 1.442695
    %v343 = vpow.pop %v342
    %v344 = vadd.f32 %v343, 1.0
    %v345 = vrcp.pop %v344
    %v346 = vmul.f32 %v344, %v345
    %v347 = vsub.f32 1.0, %v346
    %v348 = vmul.f32 %v345, %v347
    %v349 = vadd.f32 %v345, %v348
    %vm350 = vweird.f32 %v344
    %vm351 = vweird.f32 %v345
    %vm352 = vmor %vm350, %vm351
    %v353 = vsel %vm352, %v345, %v349
    %v354 = vand.u32 2147483647, %v344
    %vm355 = vcmp.eq.f32.partialorder %v354, 8.507059e+37
    %v356 = vand.u32 %v344, 2147483648
    %v357 = vor.u32 1.1754944e-38, %v356
    %v358 = vsel %vm355, %v357, %v353
    %v359 = vmul.f32 1.0, %v358
    %v360 = vtanh.pop %v340
    %v362 = vrot.slane %v303, 4
    %v364 = vmul.f32 %v359, %v362
    %366 = vrot.lane.b32.xlu0 %v360, 64
    %v367 = vpop.permute.xlu0 %366
    %v369 = vmul.f32 %v359, %v367
    %371 = vrot.lane.b32.xlu0 %v369, 32
    %v372 = vpop.permute.xlu0 %371
    %v374 = vadd.f32 %v364, %v372
    %v375 = vtanh.pop %v374
    %377 = vrot.lane.b32.xlu0 %v375, 64
    %v378 = vpop.permute.xlu0 %377
    %v380 = vmul.f32 %v359, %v378
    %382 = vrot.lane.b32.xlu0 %v380, 32
    %v383 = vpop.permute.xlu0 %382
    %385 = vst.msk [vmem:[#allocation2 + $0x8] sm:$0xf0] %vm242, %v383
    %v386 = vrot.slane %v380, 4
    %387 = vrot.lane.b32.xlu0 %v386, 32
    %v388 = vpop.permute.xlu0 %387
    %v389 = vsel %vm104, %v388, 0
    %391 = vmatpush.msra.mxu0 0.0
    %392 = vmatpush.msra.mxu0 0.0
    %393 = vmatpush.msra.mxu0 0.0
    %394 = vmatpush.msra.mxu0 0.0
    %395 = vmatpush.msra.mxu0 0.0
    %396 = vmatpush.msra.mxu0 0.0
    %397 = vmatpush.msra.mxu0 0.0
    %398 = vmatpush.msra.mxu0 0.0
    %399 = vmatpush.msra.mxu0 0.0
    %400 = vmatpush.msra.mxu0 0.0
    %401 = vmatpush.msra.mxu0 0.0
    %402 = vmatpush.msra.mxu0 0.0
    %403 = vmatpush.msra.mxu0 %v55
    %404 = vmatpush.msra.mxu0 %v54
    %405 = vmatpush.msra.mxu0 %v53
    %406 = vmatpush.msra.mxu0 %v52
    %407 = vmatmul.f32.gmra.mxu0 %v389
    %v408 = vpop.f32.mrf.mxu0
    %v409 = vadd.f32 0.0, %v408
    %410 = vdwg.mxu0
    %v411 = vadd.f32 %v99, %v409
    %v412 = vxor.u32 %v411, 2147483648
    %v413 = vmul.f32 %v412, 1.442695
    %v414 = vpow.pop %v413
    %v415 = vadd.f32 %v414, 1.0
    %v416 = vrcp.pop %v415
    %v417 = vmul.f32 %v415, %v416
    %v418 = vsub.f32 1.0, %v417
    %v419 = vmul.f32 %v416, %v418
    %v420 = vadd.f32 %v416, %v419
    %vm421 = vweird.f32 %v415
    %vm422 = vweird.f32 %v416
    %vm423 = vmor %vm421, %vm422
    %v424 = vsel %vm423, %v416, %v420
    %v425 = vand.u32 2147483647, %v415
    %vm426 = vcmp.eq.f32.partialorder %v425, 8.507059e+37
    %v427 = vand.u32 %v415, 2147483648
    %v428 = vor.u32 1.1754944e-38, %v427
    %v429 = vsel %vm426, %v428, %v424
    %v430 = vmul.f32 1.0, %v429
    %v431 = vtanh.pop %v411
    %v433 = vrot.slane %v374, 4
    %v435 = vmul.f32 %v430, %v433
    %437 = vrot.lane.b32.xlu0 %v431, 64
    %v438 = vpop.permute.xlu0 %437
    %v440 = vmul.f32 %v430, %v438
    %442 = vrot.lane.b32.xlu0 %v440, 32
    %v443 = vpop.permute.xlu0 %442
    %v445 = vadd.f32 %v435, %v443
    %v446 = vtanh.pop %v445
    %448 = vrot.lane.b32.xlu0 %v446, 64
    %v449 = vpop.permute.xlu0 %448
    %v451 = vmul.f32 %v430, %v449
    %453 = vrot.lane.b32.xlu0 %v451, 32
    %v454 = vpop.permute.xlu0 %453
    %456 = vst.msk [vmem:[#allocation2 + $0x10] sm:$0xf] %vm170, %v454
    %v457 = vsel %vm104, %v454, 0
    %459 = vmatpush.msra.mxu0 0.0
    %460 = vmatpush.msra.mxu0 0.0
    %461 = vmatpush.msra.mxu0 0.0
    %462 = vmatpush.msra.mxu0 0.0
    %463 = vmatpush.msra.mxu0 0.0
    %464 = vmatpush.msra.mxu0 0.0
    %465 = vmatpush.msra.mxu0 0.0
    %466 = vmatpush.msra.mxu0 0.0
    %467 = vmatpush.msra.mxu0 0.0
    %468 = vmatpush.msra.mxu0 0.0
    %469 = vmatpush.msra.mxu0 0.0
    %470 = vmatpush.msra.mxu0 0.0
    %471 = vmatpush.msra.mxu0 %v55
    %472 = vmatpush.msra.mxu0 %v54
    %473 = vmatpush.msra.mxu0 %v53
    %474 = vmatpush.msra.mxu0 %v52
    %475 = vmatmul.f32.gmra.mxu0 %v457
    %v476 = vpop.f32.mrf.mxu0
    %v477 = vadd.f32 0.0, %v476
    %478 = vdwg.mxu0
    %v480 = vrot.slane %v477, 4
    %v482 = vadd.f32 %v99, %v480
    %v483 = vxor.u32 %v482, 2147483648
    %v484 = vmul.f32 %v483, 1.442695
    %v485 = vpow.pop %v484
    %v486 = vadd.f32 %v485, 1.0
    %v487 = vrcp.pop %v486
    %v488 = vmul.f32 %v486, %v487
    %v489 = vsub.f32 1.0, %v488
    %v490 = vmul.f32 %v487, %v489
    %v491 = vadd.f32 %v487, %v490
    %vm492 = vweird.f32 %v486
    %vm493 = vweird.f32 %v487
    %vm494 = vmor %vm492, %vm493
    %v495 = vsel %vm494, %v487, %v491
    %v496 = vand.u32 2147483647, %v486
    %vm497 = vcmp.eq.f32.partialorder %v496, 8.507059e+37
    %v498 = vand.u32 %v486, 2147483648
    %v499 = vor.u32 1.1754944e-38, %v498
    %v500 = vsel %vm497, %v499, %v495
    %v501 = vmul.f32 1.0, %v500
    %v502 = vtanh.pop %v482
    %v504 = vrot.slane %v445, 4
    %v506 = vmul.f32 %v501, %v504
    %508 = vrot.lane.b32.xlu0 %v502, 64
    %v509 = vpop.permute.xlu0 %508
    %v511 = vmul.f32 %v501, %v509
    %513 = vrot.lane.b32.xlu0 %v511, 32
    %v514 = vpop.permute.xlu0 %513
    %v516 = vadd.f32 %v506, %v514
    %v517 = vtanh.pop %v516
    %519 = vrot.lane.b32.xlu0 %v517, 64
    %v520 = vpop.permute.xlu0 %519
    %v522 = vmul.f32 %v501, %v520
    %524 = vrot.lane.b32.xlu0 %v522, 32
    %v525 = vpop.permute.xlu0 %524
    %527 = vst.msk [vmem:[#allocation2 + $0x10] sm:$0xf0] %vm242, %v525
    %v528 = vrot.slane %v522, 4
    %529 = vrot.lane.b32.xlu0 %v528, 32
    %v530 = vpop.permute.xlu0 %529
    %v531 = vsel %vm104, %v530, 0
    %533 = vmatpush.msra.mxu0 0.0
    %534 = vmatpush.msra.mxu0 0.0
    %535 = vmatpush.msra.mxu0 0.0
    %536 = vmatpush.msra.mxu0 0.0
    %537 = vmatpush.msra.mxu0 0.0
    %538 = vmatpush.msra.mxu0 0.0
    %539 = vmatpush.msra.mxu0 0.0
    %540 = vmatpush.msra.mxu0 0.0
    %541 = vmatpush.msra.mxu0 0.0
    %542 = vmatpush.msra.mxu0 0.0
    %543 = vmatpush.msra.mxu0 0.0
    %544 = vmatpush.msra.mxu0 0.0
    %545 = vmatpush.msra.mxu0 %v55
    %546 = vmatpush.msra.mxu0 %v54
    %547 = vmatpush.msra.mxu0 %v53
    %548 = vmatpush.msra.mxu0 %v52
    %549 = vmatmul.f32.gmra.mxu0 %v531
    %v550 = vpop.f32.mrf.mxu0
    %v551 = vadd.f32 0.0, %v550
    %552 = vdwg.mxu0
    %v553 = vadd.f32 %v102, %v551
    %v554 = vxor.u32 %v553, 2147483648
    %v555 = vmul.f32 %v554, 1.442695
    %v556 = vpow.pop %v555
    %v557 = vadd.f32 %v556, 1.0
    %v558 = vrcp.pop %v557
    %v559 = vmul.f32 %v557, %v558
    %v560 = vsub.f32 1.0, %v559
    %v561 = vmul.f32 %v558, %v560
    %v562 = vadd.f32 %v558, %v561
    %vm563 = vweird.f32 %v557
    %vm564 = vweird.f32 %v558
    %vm565 = vmor %vm563, %vm564
    %v566 = vsel %vm565, %v558, %v562
    %v567 = vand.u32 2147483647, %v557
    %vm568 = vcmp.eq.f32.partialorder %v567, 8.507059e+37
    %v569 = vand.u32 %v557, 2147483648
    %v570 = vor.u32 1.1754944e-38, %v569
    %v571 = vsel %vm568, %v570, %v566
    %v572 = vmul.f32 1.0, %v571
    %v573 = vtanh.pop %v553
    %v575 = vrot.slane %v516, 4
    %v577 = vmul.f32 %v572, %v575
    %579 = vrot.lane.b32.xlu0 %v573, 64
    %v580 = vpop.permute.xlu0 %579
    %v582 = vmul.f32 %v572, %v580
    %584 = vrot.lane.b32.xlu0 %v582, 32
    %v585 = vpop.permute.xlu0 %584
    %v587 = vadd.f32 %v577, %v585
    %v588 = vtanh.pop %v587
    %590 = vrot.lane.b32.xlu0 %v588, 64
    %v591 = vpop.permute.xlu0 %590
    %v593 = vmul.f32 %v572, %v591
    %595 = vrot.lane.b32.xlu0 %v593, 32
    %v596 = vpop.permute.xlu0 %595
    %598 = vst.msk [vmem:[#allocation2 + $0x18] sm:$0xf] %vm170, %v596
    %v599 = vsel %vm104, %v596, 0
    %601 = vmatpush.msra.mxu0 0.0
    %602 = vmatpush.msra.mxu0 0.0
    %603 = vmatpush.msra.mxu0 0.0
    %604 = vmatpush.msra.mxu0 0.0
    %605 = vmatpush.msra.mxu0 0.0
    %606 = vmatpush.msra.mxu0 0.0
    %607 = vmatpush.msra.mxu0 0.0
    %608 = vmatpush.msra.mxu0 0.0
    %609 = vmatpush.msra.mxu0 0.0
    %610 = vmatpush.msra.mxu0 0.0
    %611 = vmatpush.msra.mxu0 0.0
    %612 = vmatpush.msra.mxu0 0.0
    %613 = vmatpush.msra.mxu0 %v55
    %614 = vmatpush.msra.mxu0 %v54
    %615 = vmatpush.msra.mxu0 %v53
    %616 = vmatpush.msra.mxu0 %v52
    %617 = vmatmul.f32.gmra.mxu0 %v599
    %v618 = vpop.f32.mrf.mxu0
    %v619 = vadd.f32 0.0, %v618
    %620 = vdwg.mxu0
    %v622 = vrot.slane %v619, 4
    %v624 = vadd.f32 %v102, %v622
    %v625 = vxor.u32 %v624, 2147483648
    %v626 = vmul.f32 %v625, 1.442695
    %v627 = vpow.pop %v626
    %v628 = vadd.f32 %v627, 1.0
    %v629 = vrcp.pop %v628
    %v630 = vmul.f32 %v628, %v629
    %v631 = vsub.f32 1.0, %v630
    %v632 = vmul.f32 %v629, %v631
    %v633 = vadd.f32 %v629, %v632
    %vm634 = vweird.f32 %v628
    %vm635 = vweird.f32 %v629
    %vm636 = vmor %vm634, %vm635
    %v637 = vsel %vm636, %v629, %v633
    %v638 = vand.u32 2147483647, %v628
    %vm639 = vcmp.eq.f32.partialorder %v638, 8.507059e+37
    %v640 = vand.u32 %v628, 2147483648
    %v641 = vor.u32 1.1754944e-38, %v640
    %v642 = vsel %vm639, %v641, %v637
    %v643 = vmul.f32 1.0, %v642
    %v644 = vtanh.pop %v624
    %v646 = vrot.slane %v587, 4
    %v648 = vmul.f32 %v643, %v646
    %650 = vrot.lane.b32.xlu0 %v644, 64
    %v651 = vpop.permute.xlu0 %650
    %v653 = vmul.f32 %v643, %v651
    %655 = vrot.lane.b32.xlu0 %v653, 32
    %v656 = vpop.permute.xlu0 %655
    %v658 = vadd.f32 %v648, %v656
    %v659 = vtanh.pop %v658
    %661 = vrot.lane.b32.xlu0 %v659, 64
    %v662 = vpop.permute.xlu0 %661
    %v664 = vmul.f32 %v643, %v662
    %666 = vrot.lane.b32.xlu0 %v664, 32
    %v667 = vpop.permute.xlu0 %666
    %669 = vst.msk [vmem:[#allocation2 + $0x18] sm:$0xf0] %vm242, %v667
    %v670 = vld [vmem:[#allocation2] sm:$0xff]
    %v671 = vld [vmem:[#allocation2 + $0x8] sm:$0xff]
    %v672 = vld [vmem:[#allocation2 + $0x10] sm:$0xff]
    %v673 = vld [vmem:[#allocation2 + $0x18] sm:$0xff]
    %v674 = vld [vmem:[#allocation4] sm:$0xff]
    %v675 = vld [vmem:[#allocation4 + $0x8] sm:$0xff]
    %v676 = vld [vmem:[#allocation4 + $0x10] sm:$0xff]
    %v677 = vld [vmem:[#allocation4 + $0x18] sm:$0xff]
    %v678 = vld [vmem:[%s4] sm:$0xff]
    %v679 = vld [vmem:[%s4 + $0x8] sm:$0xff]
    %v680 = vld [vmem:[%s4 + $0x10] sm:$0xff]
    %v681 = vld [vmem:[%s4 + $0x18] sm:$0xff]
    %v682 = vld [vmem:[%s6] sm:$0x1]
    %v684 = vperm.slane %v682, 0
    %v687 = vsel %vm104, %v670, 0
    %v690 = vsel %vm104, %v671, 0
    %v693 = vsel %vm104, %v672, 0
    %v696 = vsel %vm104, %v673, 0
    %698 = vmatpush.msra.mxu0 0.0
    %699 = vmatpush.msra.mxu0 0.0
    %700 = vmatpush.msra.mxu0 0.0
    %701 = vmatpush.msra.mxu0 0.0
    %702 = vmatpush.msra.mxu0 0.0
    %703 = vmatpush.msra.mxu0 0.0
    %704 = vmatpush.msra.mxu0 0.0
    %705 = vmatpush.msra.mxu0 0.0
    %706 = vmatpush.msra.mxu0 0.0
    %707 = vmatpush.msra.mxu0 0.0
    %708 = vmatpush.msra.mxu0 0.0
    %709 = vmatpush.msra.mxu0 0.0
    %710 = vmatpush.msra.mxu0 %v681
    %711 = vmatpush.msra.mxu0 %v680
    %712 = vmatpush.msra.mxu0 %v679
    %713 = vmatpush.msra.mxu0 %v678
    %714 = vmatmul.f32.gmra.mxu0 %v687
    %v715 = vpop.f32.mrf.mxu0
    %v716 = vadd.f32 %v684, %v715
    %717 = vmatmul.f32.gmra.mxu0 %v690
    %v718 = vpop.f32.mrf.mxu0
    %v719 = vadd.f32 %v684, %v718
    %720 = vmatmul.f32.gmra.mxu0 %v693
    %v721 = vpop.f32.mrf.mxu0
    %v722 = vadd.f32 %v684, %v721
    %723 = vmatmul.f32.gmra.mxu0 %v696
    %v724 = vpop.f32.mrf.mxu0
    %v725 = vadd.f32 %v684, %v724
    %726 = vdwg.mxu0
    %727 = vmatpush.msra.mxu0 0.0
    %728 = vmatpush.msra.mxu0 0.0
    %729 = vmatpush.msra.mxu0 0.0
    %730 = vmatpush.msra.mxu0 0.0
    %731 = vmatpush.msra.mxu0 0.0
    %732 = vmatpush.msra.mxu0 0.0
    %733 = vmatpush.msra.mxu0 0.0
    %734 = vmatpush.msra.mxu0 0.0
    %735 = vmatpush.msra.mxu0 0.0
    %736 = vmatpush.msra.mxu0 0.0
    %737 = vmatpush.msra.mxu0 0.0
    %738 = vmatpush.msra.mxu0 0.0
    %739 = vmatpush.msra.mxu0 %v677
    %740 = vmatpush.msra.mxu0 %v676
    %741 = vmatpush.msra.mxu0 %v675
    %742 = vmatpush.msra.mxu0 %v674
    %743 = vmatmul.f32.gmra.mxu0 %v106
    %v744 = vpop.f32.mrf.mxu0
    %v745 = vadd.f32 0.0, %v744
    %746 = vdwg.mxu0
    %v747 = vadd.f32 %v716, %v745
    %v748 = vxor.u32 %v747, 2147483648
    %v749 = vmul.f32 %v748, 1.442695
    %v750 = vpow.pop %v749
    %v751 = vadd.f32 %v750, 1.0
    %v752 = vrcp.pop %v751
    %v753 = vmul.f32 %v751, %v752
    %v754 = vsub.f32 1.0, %v753
    %v755 = vmul.f32 %v752, %v754
    %v756 = vadd.f32 %v752, %v755
    %vm757 = vweird.f32 %v751
    %vm758 = vweird.f32 %v752
    %vm759 = vmor %vm757, %vm758
    %v760 = vsel %vm759, %v752, %v756
    %v761 = vand.u32 2147483647, %v751
    %vm762 = vcmp.eq.f32.partialorder %v761, 8.507059e+37
    %v763 = vand.u32 %v751, 2147483648
    %v764 = vor.u32 1.1754944e-38, %v763
    %v765 = vsel %vm762, %v764, %v760
    %v766 = vmul.f32 1.0, %v765
    %v767 = vtanh.pop %v747
    %v768 = vmul.f32 %v766, 0.0
    %770 = vrot.lane.b32.xlu0 %v767, 64
    %v771 = vpop.permute.xlu0 %770
    %v773 = vmul.f32 %v766, %v771
    %775 = vrot.lane.b32.xlu0 %v773, 32
    %v776 = vpop.permute.xlu0 %775
    %v778 = vadd.f32 %v768, %v776
    %v779 = vtanh.pop %v778
    %781 = vrot.lane.b32.xlu0 %v779, 64
    %v782 = vpop.permute.xlu0 %781
    %v784 = vmul.f32 %v766, %v782
    %786 = vrot.lane.b32.xlu0 %v784, 32
    %v787 = vpop.permute.xlu0 %786
    %vm789 = vcmask 257027
    %790 = vst.msk [vmem:[#allocation3 - $0x3] sm:$0x8] %vm789, %v787
    %v791 = vsel %vm104, %v787, 0
    %793 = vmatpush.msra.mxu0 0.0
    %794 = vmatpush.msra.mxu0 0.0
    %795 = vmatpush.msra.mxu0 0.0
    %796 = vmatpush.msra.mxu0 0.0
    %797 = vmatpush.msra.mxu0 0.0
    %798 = vmatpush.msra.mxu0 0.0
    %799 = vmatpush.msra.mxu0 0.0
    %800 = vmatpush.msra.mxu0 0.0
    %801 = vmatpush.msra.mxu0 0.0
    %802 = vmatpush.msra.mxu0 0.0
    %803 = vmatpush.msra.mxu0 0.0
    %804 = vmatpush.msra.mxu0 0.0
    %805 = vmatpush.msra.mxu0 %v677
    %806 = vmatpush.msra.mxu0 %v676
    %807 = vmatpush.msra.mxu0 %v675
    %808 = vmatpush.msra.mxu0 %v674
    %809 = vmatmul.f32.gmra.mxu0 %v791
    %v810 = vpop.f32.mrf.mxu0
    %v811 = vadd.f32 0.0, %v810
    %812 = vdwg.mxu0
    %v814 = vrot.slane %v811, 4
    %v816 = vadd.f32 %v716, %v814
    %v817 = vxor.u32 %v816, 2147483648
    %v818 = vmul.f32 %v817, 1.442695
    %v819 = vpow.pop %v818
    %v820 = vadd.f32 %v819, 1.0
    %v821 = vrcp.pop %v820
    %v822 = vmul.f32 %v820, %v821
    %v823 = vsub.f32 1.0, %v822
    %v824 = vmul.f32 %v821, %v823
    %v825 = vadd.f32 %v821, %v824
    %vm826 = vweird.f32 %v820
    %vm827 = vweird.f32 %v821
    %vm828 = vmor %vm826, %vm827
    %v829 = vsel %vm828, %v821, %v825
    %v830 = vand.u32 2147483647, %v820
    %vm831 = vcmp.eq.f32.partialorder %v830, 8.507059e+37
    %v832 = vand.u32 %v820, 2147483648
    %v833 = vor.u32 1.1754944e-38, %v832
    %v834 = vsel %vm831, %v833, %v829
    %v835 = vmul.f32 1.0, %v834
    %v836 = vtanh.pop %v816
    %v838 = vrot.slane %v778, 4
    %v840 = vmul.f32 %v835, %v838
    %842 = vrot.lane.b32.xlu0 %v836, 64
    %v843 = vpop.permute.xlu0 %842
    %v845 = vmul.f32 %v835, %v843
    %847 = vrot.lane.b32.xlu0 %v845, 32
    %v848 = vpop.permute.xlu0 %847
    %v850 = vadd.f32 %v840, %v848
    %v851 = vtanh.pop %v850
    %853 = vrot.lane.b32.xlu0 %v851, 64
    %v854 = vpop.permute.xlu0 %853
    %v856 = vmul.f32 %v835, %v854
    %858 = vrot.lane.b32.xlu0 %v856, 32
    %v859 = vpop.permute.xlu0 %858
    %vm861 = vcmask 261127
    %862 = vst.msk [vmem:[#allocation3 - $0x6] sm:$0x80] %vm861, %v859
    %v863 = vrot.slane %v856, 4
    %864 = vrot.lane.b32.xlu0 %v863, 32
    %v865 = vpop.permute.xlu0 %864
    %v866 = vsel %vm104, %v865, 0
    %868 = vmatpush.msra.mxu0 0.0
    %869 = vmatpush.msra.mxu0 0.0
    %870 = vmatpush.msra.mxu0 0.0
    %871 = vmatpush.msra.mxu0 0.0
    %872 = vmatpush.msra.mxu0 0.0
    %873 = vmatpush.msra.mxu0 0.0
    %874 = vmatpush.msra.mxu0 0.0
    %875 = vmatpush.msra.mxu0 0.0
    %876 = vmatpush.msra.mxu0 0.0
    %877 = vmatpush.msra.mxu0 0.0
    %878 = vmatpush.msra.mxu0 0.0
    %879 = vmatpush.msra.mxu0 0.0
    %880 = vmatpush.msra.mxu0 %v677
    %881 = vmatpush.msra.mxu0 %v676
    %882 = vmatpush.msra.mxu0 %v675
    %883 = vmatpush.msra.mxu0 %v674
    %884 = vmatmul.f32.gmra.mxu0 %v866
    %v885 = vpop.f32.mrf.mxu0
    %v886 = vadd.f32 0.0, %v885
    %887 = vdwg.mxu0
    %v888 = vadd.f32 %v719, %v886
    %v889 = vxor.u32 %v888, 2147483648
    %v890 = vmul.f32 %v889, 1.442695
    %v891 = vpow.pop %v890
    %v892 = vadd.f32 %v891, 1.0
    %v893 = vrcp.pop %v892
    %v894 = vmul.f32 %v892, %v893
    %v895 = vsub.f32 1.0, %v894
    %v896 = vmul.f32 %v893, %v895
    %v897 = vadd.f32 %v893, %v896
    %vm898 = vweird.f32 %v892
    %vm899 = vweird.f32 %v893
    %vm900 = vmor %vm898, %vm899
    %v901 = vsel %vm900, %v893, %v897
    %v902 = vand.u32 2147483647, %v892
    %vm903 = vcmp.eq.f32.partialorder %v902, 8.507059e+37
    %v904 = vand.u32 %v892, 2147483648
    %v905 = vor.u32 1.1754944e-38, %v904
    %v906 = vsel %vm903, %v905, %v901
    %v907 = vmul.f32 1.0, %v906
    %v908 = vtanh.pop %v888
    %v910 = vrot.slane %v850, 4
    %v912 = vmul.f32 %v907, %v910
    %914 = vrot.lane.b32.xlu0 %v908, 64
    %v915 = vpop.permute.xlu0 %914
    %v917 = vmul.f32 %v907, %v915
    %919 = vrot.lane.b32.xlu0 %v917, 32
    %v920 = vpop.permute.xlu0 %919
    %v922 = vadd.f32 %v912, %v920
    %v923 = vtanh.pop %v922
    %925 = vrot.lane.b32.xlu0 %v923, 64
    %v926 = vpop.permute.xlu0 %925
    %v928 = vmul.f32 %v907, %v926
    %930 = vrot.lane.b32.xlu0 %v928, 32
    %v931 = vpop.permute.xlu0 %930
    %933 = vst.msk [vmem:[#allocation3 - $0x1] sm:$0x8] %vm789, %v931
    %v934 = vsel %vm104, %v931, 0
    %936 = vmatpush.msra.mxu0 0.0
    %937 = vmatpush.msra.mxu0 0.0
    %938 = vmatpush.msra.mxu0 0.0
    %939 = vmatpush.msra.mxu0 0.0
    %940 = vmatpush.msra.mxu0 0.0
    %941 = vmatpush.msra.mxu0 0.0
    %942 = vmatpush.msra.mxu0 0.0
    %943 = vmatpush.msra.mxu0 0.0
    %944 = vmatpush.msra.mxu0 0.0
    %945 = vmatpush.msra.mxu0 0.0
    %946 = vmatpush.msra.mxu0 0.0
    %947 = vmatpush.msra.mxu0 0.0
    %948 = vmatpush.msra.mxu0 %v677
    %949 = vmatpush.msra.mxu0 %v676
    %950 = vmatpush.msra.mxu0 %v675
    %951 = vmatpush.msra.mxu0 %v674
    %952 = vmatmul.f32.gmra.mxu0 %v934
    %v953 = vpop.f32.mrf.mxu0
    %v954 = vadd.f32 0.0, %v953
    %955 = vdwg.mxu0
    %v957 = vrot.slane %v954, 4
    %v959 = vadd.f32 %v719, %v957
    %v960 = vxor.u32 %v959, 2147483648
    %v961 = vmul.f32 %v960, 1.442695
    %v962 = vpow.pop %v961
    %v963 = vadd.f32 %v962, 1.0
    %v964 = vrcp.pop %v963
    %v965 = vmul.f32 %v963, %v964
    %v966 = vsub.f32 1.0, %v965
    %v967 = vmul.f32 %v964, %v966
    %v968 = vadd.f32 %v964, %v967
    %vm969 = vweird.f32 %v963
    %vm970 = vweird.f32 %v964
    %vm971 = vmor %vm969, %vm970
    %v972 = vsel %vm971, %v964, %v968
    %v973 = vand.u32 2147483647, %v963
    %vm974 = vcmp.eq.f32.partialorder %v973, 8.507059e+37
    %v975 = vand.u32 %v963, 2147483648
    %v976 = vor.u32 1.1754944e-38, %v975
    %v977 = vsel %vm974, %v976, %v972
    %v978 = vmul.f32 1.0, %v977
    %v979 = vtanh.pop %v959
    %v981 = vrot.slane %v922, 4
    %v983 = vmul.f32 %v978, %v981
    %985 = vrot.lane.b32.xlu0 %v979, 64
    %v986 = vpop.permute.xlu0 %985
    %v988 = vmul.f32 %v978, %v986
    %990 = vrot.lane.b32.xlu0 %v988, 32
    %v991 = vpop.permute.xlu0 %990
    %v993 = vadd.f32 %v983, %v991
    %v994 = vtanh.pop %v993
    %996 = vrot.lane.b32.xlu0 %v994, 64
    %v997 = vpop.permute.xlu0 %996
    %v999 = vmul.f32 %v978, %v997
    %1001 = vrot.lane.b32.xlu0 %v999, 32
    %v1002 = vpop.permute.xlu0 %1001
    %1004 = vst.msk [vmem:[#allocation3 - $0x4] sm:$0x80] %vm861, %v1002
    %v1005 = vrot.slane %v999, 4
    %1006 = vrot.lane.b32.xlu0 %v1005, 32
    %v1007 = vpop.permute.xlu0 %1006
    %v1008 = vsel %vm104, %v1007, 0
    %1010 = vmatpush.msra.mxu0 0.0
    %1011 = vmatpush.msra.mxu0 0.0
    %1012 = vmatpush.msra.mxu0 0.0
    %1013 = vmatpush.msra.mxu0 0.0
    %1014 = vmatpush.msra.mxu0 0.0
    %1015 = vmatpush.msra.mxu0 0.0
    %1016 = vmatpush.msra.mxu0 0.0
    %1017 = vmatpush.msra.mxu0 0.0
    %1018 = vmatpush.msra.mxu0 0.0
    %1019 = vmatpush.msra.mxu0 0.0
    %1020 = vmatpush.msra.mxu0 0.0
    %1021 = vmatpush.msra.mxu0 0.0
    %1022 = vmatpush.msra.mxu0 %v677
    %1023 = vmatpush.msra.mxu0 %v676
    %1024 = vmatpush.msra.mxu0 %v675
    %1025 = vmatpush.msra.mxu0 %v674
    %1026 = vmatmul.f32.gmra.mxu0 %v1008
    %v1027 = vpop.f32.mrf.mxu0
    %v1028 = vadd.f32 0.0, %v1027
    %1029 = vdwg.mxu0
    %v1030 = vadd.f32 %v722, %v1028
    %v1031 = vxor.u32 %v1030, 2147483648
    %v1032 = vmul.f32 %v1031, 1.442695
    %v1033 = vpow.pop %v1032
    %v1034 = vadd.f32 %v1033, 1.0
    %v1035 = vrcp.pop %v1034
    %v1036 = vmul.f32 %v1034, %v1035
    %v1037 = vsub.f32 1.0, %v1036
    %v1038 = vmul.f32 %v1035, %v1037
    %v1039 = vadd.f32 %v1035, %v1038
    %vm1040 = vweird.f32 %v1034
    %vm1041 = vweird.f32 %v1035
    %vm1042 = vmor %vm1040, %vm1041
    %v1043 = vsel %vm1042, %v1035, %v1039
    %v1044 = vand.u32 2147483647, %v1034
    %vm1045 = vcmp.eq.f32.partialorder %v1044, 8.507059e+37
    %v1046 = vand.u32 %v1034, 2147483648
    %v1047 = vor.u32 1.1754944e-38, %v1046
    %v1048 = vsel %vm1045, %v1047, %v1043
    %v1049 = vmul.f32 1.0, %v1048
    %v1050 = vtanh.pop %v1030
    %v1052 = vrot.slane %v993, 4
    %v1054 = vmul.f32 %v1049, %v1052
    %1056 = vrot.lane.b32.xlu0 %v1050, 64
    %v1057 = vpop.permute.xlu0 %1056
    %v1059 = vmul.f32 %v1049, %v1057
    %1061 = vrot.lane.b32.xlu0 %v1059, 32
    %v1062 = vpop.permute.xlu0 %1061
    %v1064 = vadd.f32 %v1054, %v1062
    %v1065 = vtanh.pop %v1064
    %1067 = vrot.lane.b32.xlu0 %v1065, 64
    %v1068 = vpop.permute.xlu0 %1067
    %v1070 = vmul.f32 %v1049, %v1068
    %1072 = vrot.lane.b32.xlu0 %v1070, 32
    %v1073 = vpop.permute.xlu0 %1072
    %1075 = vst.msk [vmem:[#allocation3 + $0x1] sm:$0x8] %vm789, %v1073
    %v1076 = vsel %vm104, %v1073, 0
    %1078 = vmatpush.msra.mxu0 0.0
    %1079 = vmatpush.msra.mxu0 0.0
    %1080 = vmatpush.msra.mxu0 0.0
    %1081 = vmatpush.msra.mxu0 0.0
    %1082 = vmatpush.msra.mxu0 0.0
    %1083 = vmatpush.msra.mxu0 0.0
    %1084 = vmatpush.msra.mxu0 0.0
    %1085 = vmatpush.msra.mxu0 0.0
    %1086 = vmatpush.msra.mxu0 0.0
    %1087 = vmatpush.msra.mxu0 0.0
    %1088 = vmatpush.msra.mxu0 0.0
    %1089 = vmatpush.msra.mxu0 0.0
    %1090 = vmatpush.msra.mxu0 %v677
    %1091 = vmatpush.msra.mxu0 %v676
    %1092 = vmatpush.msra.mxu0 %v675
    %1093 = vmatpush.msra.mxu0 %v674
    %1094 = vmatmul.f32.gmra.mxu0 %v1076
    %v1095 = vpop.f32.mrf.mxu0
    %v1096 = vadd.f32 0.0, %v1095
    %1097 = vdwg.mxu0
    %v1099 = vrot.slane %v1096, 4
    %v1101 = vadd.f32 %v722, %v1099
    %v1102 = vxor.u32 %v1101, 2147483648
    %v1103 = vmul.f32 %v1102, 1.442695
    %v1104 = vpow.pop %v1103
    %v1105 = vadd.f32 %v1104, 1.0
    %v1106 = vrcp.pop %v1105
    %v1107 = vmul.f32 %v1105, %v1106
    %v1108 = vsub.f32 1.0, %v1107
    %v1109 = vmul.f32 %v1106, %v1108
    %v1110 = vadd.f32 %v1106, %v1109
    %vm1111 = vweird.f32 %v1105
    %vm1112 = vweird.f32 %v1106
    %vm1113 = vmor %vm1111, %vm1112
    %v1114 = vsel %vm1113, %v1106, %v1110
    %v1115 = vand.u32 2147483647, %v1105
    %vm1116 = vcmp.eq.f32.partialorder %v1115, 8.507059e+37
    %v1117 = vand.u32 %v1105, 2147483648
    %v1118 = vor.u32 1.1754944e-38, %v1117
    %v1119 = vsel %vm1116, %v1118, %v1114
    %v1120 = vmul.f32 1.0, %v1119
    %v1121 = vtanh.pop %v1101
    %v1123 = vrot.slane %v1064, 4
    %v1125 = vmul.f32 %v1120, %v1123
    %1127 = vrot.lane.b32.xlu0 %v1121, 64
    %v1128 = vpop.permute.xlu0 %1127
    %v1130 = vmul.f32 %v1120, %v1128
    %1132 = vrot.lane.b32.xlu0 %v1130, 32
    %v1133 = vpop.permute.xlu0 %1132
    %v1135 = vadd.f32 %v1125, %v1133
    %v1136 = vtanh.pop %v1135
    %1138 = vrot.lane.b32.xlu0 %v1136, 64
    %v1139 = vpop.permute.xlu0 %1138
    %v1141 = vmul.f32 %v1120, %v1139
    %1143 = vrot.lane.b32.xlu0 %v1141, 32
    %v1144 = vpop.permute.xlu0 %1143
    %1146 = vst.msk [vmem:[#allocation3 - $0x2] sm:$0x80] %vm861, %v1144
    %v1147 = vrot.slane %v1141, 4
    %1148 = vrot.lane.b32.xlu0 %v1147, 32
    %v1149 = vpop.permute.xlu0 %1148
    %v1150 = vsel %vm104, %v1149, 0
    %1152 = vmatpush.msra.mxu0 0.0
    %1153 = vmatpush.msra.mxu0 0.0
    %1154 = vmatpush.msra.mxu0 0.0
    %1155 = vmatpush.msra.mxu0 0.0
    %1156 = vmatpush.msra.mxu0 0.0
    %1157 = vmatpush.msra.mxu0 0.0
    %1158 = vmatpush.msra.mxu0 0.0
    %1159 = vmatpush.msra.mxu0 0.0
    %1160 = vmatpush.msra.mxu0 0.0
    %1161 = vmatpush.msra.mxu0 0.0
    %1162 = vmatpush.msra.mxu0 0.0
    %1163 = vmatpush.msra.mxu0 0.0
    %1164 = vmatpush.msra.mxu0 %v677
    %1165 = vmatpush.msra.mxu0 %v676
    %1166 = vmatpush.msra.mxu0 %v675
    %1167 = vmatpush.msra.mxu0 %v674
    %1168 = vmatmul.f32.gmra.mxu0 %v1150
    %v1169 = vpop.f32.mrf.mxu0
    %v1170 = vadd.f32 0.0, %v1169
    %1171 = vdwg.mxu0
    %v1172 = vadd.f32 %v725, %v1170
    %v1173 = vxor.u32 %v1172, 2147483648
    %v1174 = vmul.f32 %v1173, 1.442695
    %v1175 = vpow.pop %v1174
    %v1176 = vadd.f32 %v1175, 1.0
    %v1177 = vrcp.pop %v1176
    %v1178 = vmul.f32 %v1176, %v1177
    %v1179 = vsub.f32 1.0, %v1178
    %v1180 = vmul.f32 %v1177, %v1179
    %v1181 = vadd.f32 %v1177, %v1180
    %vm1182 = vweird.f32 %v1176
    %vm1183 = vweird.f32 %v1177
    %vm1184 = vmor %vm1182, %vm1183
    %v1185 = vsel %vm1184, %v1177, %v1181
    %v1186 = vand.u32 2147483647, %v1176
    %vm1187 = vcmp.eq.f32.partialorder %v1186, 8.507059e+37
    %v1188 = vand.u32 %v1176, 2147483648
    %v1189 = vor.u32 1.1754944e-38, %v1188
    %v1190 = vsel %vm1187, %v1189, %v1185
    %v1191 = vmul.f32 1.0, %v1190
    %v1192 = vtanh.pop %v1172
    %v1194 = vrot.slane %v1135, 4
    %v1196 = vmul.f32 %v1191, %v1194
    %1198 = vrot.lane.b32.xlu0 %v1192, 64
    %v1199 = vpop.permute.xlu0 %1198
    %v1201 = vmul.f32 %v1191, %v1199
    %1203 = vrot.lane.b32.xlu0 %v1201, 32
    %v1204 = vpop.permute.xlu0 %1203
    %v1206 = vadd.f32 %v1196, %v1204
    %v1207 = vtanh.pop %v1206
    %1209 = vrot.lane.b32.xlu0 %v1207, 64
    %v1210 = vpop.permute.xlu0 %1209
    %v1212 = vmul.f32 %v1191, %v1210
    %1214 = vrot.lane.b32.xlu0 %v1212, 32
    %v1215 = vpop.permute.xlu0 %1214
    %1217 = vst.msk [vmem:[#allocation3 + $0x3] sm:$0x8] %vm789, %v1215
    %v1218 = vsel %vm104, %v1215, 0
    %1220 = vmatpush.msra.mxu0 0.0
    %1221 = vmatpush.msra.mxu0 0.0
    %1222 = vmatpush.msra.mxu0 0.0
    %1223 = vmatpush.msra.mxu0 0.0
    %1224 = vmatpush.msra.mxu0 0.0
    %1225 = vmatpush.msra.mxu0 0.0
    %1226 = vmatpush.msra.mxu0 0.0
    %1227 = vmatpush.msra.mxu0 0.0
    %1228 = vmatpush.msra.mxu0 0.0
    %1229 = vmatpush.msra.mxu0 0.0
    %1230 = vmatpush.msra.mxu0 0.0
    %1231 = vmatpush.msra.mxu0 0.0
    %1232 = vmatpush.msra.mxu0 %v677
    %1233 = vmatpush.msra.mxu0 %v676
    %1234 = vmatpush.msra.mxu0 %v675
    %1235 = vmatpush.msra.mxu0 %v674
    %1236 = vmatmul.f32.gmra.mxu0 %v1218
    %v1237 = vpop.f32.mrf.mxu0
    %v1238 = vadd.f32 0.0, %v1237
    %1239 = vdwg.mxu0
    %v1241 = vrot.slane %v1238, 4
    %v1243 = vadd.f32 %v725, %v1241
    %v1244 = vxor.u32 %v1243, 2147483648
    %v1245 = vmul.f32 %v1244, 1.442695
    %v1246 = vpow.pop %v1245
    %v1247 = vadd.f32 %v1246, 1.0
    %v1248 = vrcp.pop %v1247
    %v1249 = vmul.f32 %v1247, %v1248
    %v1250 = vsub.f32 1.0, %v1249
    %v1251 = vmul.f32 %v1248, %v1250
    %v1252 = vadd.f32 %v1248, %v1251
    %vm1253 = vweird.f32 %v1247
    %vm1254 = vweird.f32 %v1248
    %vm1255 = vmor %vm1253, %vm1254
    %v1256 = vsel %vm1255, %v1248, %v1252
    %v1257 = vand.u32 2147483647, %v1247
    %vm1258 = vcmp.eq.f32.partialorder %v1257, 8.507059e+37
    %v1259 = vand.u32 %v1247, 2147483648
    %v1260 = vor.u32 1.1754944e-38, %v1259
    %v1261 = vsel %vm1258, %v1260, %v1256
    %v1262 = vmul.f32 1.0, %v1261
    %v1263 = vtanh.pop %v1243
    %v1265 = vrot.slane %v1206, 4
    %v1267 = vmul.f32 %v1262, %v1265
    %1269 = vrot.lane.b32.xlu0 %v1263, 64
    %v1270 = vpop.permute.xlu0 %1269
    %v1272 = vmul.f32 %v1262, %v1270
    %1274 = vrot.lane.b32.xlu0 %v1272, 32
    %v1275 = vpop.permute.xlu0 %1274
    %v1277 = vadd.f32 %v1267, %v1275
    %v1278 = vtanh.pop %v1277
    %1280 = vrot.lane.b32.xlu0 %v1278, 64
    %v1281 = vpop.permute.xlu0 %1280
    %v1283 = vmul.f32 %v1262, %v1281
    %1285 = vrot.lane.b32.xlu0 %v1283, 32
    %v1286 = vpop.permute.xlu0 %1285
    %1288 = vst.msk [vmem:[#allocation3] sm:$0x80] %vm861, %v1286
    %v1289 = vld [vmem:[#allocation3] sm:$0xff]
    %v1290 = vld [vmem:[%s7] sm:$0xff]
    %v1291 = vld [vmem:[%s7 + $0x8] sm:$0xff]
    %v1292 = vld [vmem:[%s7 + $0x10] sm:$0xff]
    %v1293 = vld [vmem:[%s7 + $0x18] sm:$0xff]
    %v1294 = vld [vmem:[%s8] sm:$0x1]
    %v1296 = vperm.slane %v1294, 0
    %v1299 = vsel %vm104, %v1289, 0
    %1301 = vmatpush.msra.mxu0 0.0
    %1302 = vmatpush.msra.mxu0 0.0
    %1303 = vmatpush.msra.mxu0 0.0
    %1304 = vmatpush.msra.mxu0 0.0
    %1305 = vmatpush.msra.mxu0 0.0
    %1306 = vmatpush.msra.mxu0 0.0
    %1307 = vmatpush.msra.mxu0 0.0
    %1308 = vmatpush.msra.mxu0 0.0
    %1309 = vmatpush.msra.mxu0 0.0
    %1310 = vmatpush.msra.mxu0 0.0
    %1311 = vmatpush.msra.mxu0 0.0
    %1312 = vmatpush.msra.mxu0 0.0
    %1313 = vmatpush.msra.mxu0 %v1293
    %1314 = vmatpush.msra.mxu0 %v1292
    %1315 = vmatpush.msra.mxu0 %v1291
    %1316 = vmatpush.msra.mxu0 %v1290
    %1317 = vmatmul.f32.gmra.mxu0 %v1299
    %v1318 = vpop.f32.mrf.mxu0
    %v1319 = vadd.f32 %v1296, %v1318
    %1320 = vdwg.mxu0
    %vm1321 = vcmask 23552
    %1322 = vst.msk [vmem:[%s9] sm:$0xff] %vm1321, %v1319
    // Predicated region
    $region42: #{tpu_custom_call.1} parent=1 // pred_check
      _
    $region43: #{tpu_custom_call.1} parent=1 // pred_check_branch
      %1324 = sbr.rel (0) target = $region45
    $region44: #{tpu_custom_call.1} parent=1 // pred_region
      _
    $region45: #{tpu_custom_call.1} parent=1 // pred_fallthru
      _
    // Predicated region
    $region46: #{tpu_custom_call.1} parent=1 // pred_check
      _
    $region47: #{tpu_custom_call.1} parent=1 // pred_check_branch
      %1326 = sbr.rel (0) target = $region49
    $region48: #{tpu_custom_call.1} parent=1 // pred_region
      _
    $region49: #{tpu_custom_call.1} parent=1 // pred_fallthru
      _
    %1327 = vsyncpa [#allocation5], 1

</llo_original>
